<compile_context>
chip_gen: v7x
topology: tpu7x:2x2x1
jax: 0.10.0
libtpu: 0.0.40
codegen_flags: <defaults>
</compile_context>

<pallas_src>
import math
import numpy as np
import jax
import jax.numpy as jnp
from jax.experimental import pallas as pl
from jax.experimental.pallas import tpu as pltpu

EPS = 1e-6


# ----------------------------- Pallas kernel ------------------------------ #

def _contextual_kernel(f_ref, ms_ref, wnet_t_ref, wnet_b_ref,
                       b1_t_ref, b2_t_ref, bneck_b_ref, o_ref):
    """One row tile; P pixels packed per row (lane-dense layout).

    f_ref      : (T, P*C)    bf16  packed features
    ms_ref     : (S, T, P*C) bf16  packed multi-scale maps
    wnet_t_ref : (P*C, P*C)  bf16  block-diag weight_net weight (transposed)
    wnet_b_ref : (1, P*C)    f32   tiled weight_net bias
    b1_t_ref   : (P*C, P*O)  bf16  block-diag bottleneck weight (weighted part)
    b2_t_ref   : (P*C, P*O)  bf16  block-diag bottleneck weight (feature part)
    bneck_b_ref: (1, P*O)    f32   tiled bottleneck bias
    o_ref      : (T, P*O)
    """
    f = f_ref[...]                                   # (T, PC) bf16
    ms = ms_ref[...]                                 # (S, T, PC) bf16
    S, T, PC = ms.shape

    # All S weight_net 1x1-convs fused into a single bf16 MXU matmul (f32 acc).
    contrast = (f[None, :, :] - ms).reshape(S * T, PC)           # bf16 on VPU
    pre = (jnp.dot(contrast, wnet_t_ref[...],
                   preferred_element_type=jnp.float32)
           + wnet_b_ref[...])                                    # hoisted bias bcast
    w = jax.nn.sigmoid(pre).reshape(S, T, PC)                    # f32 (exp on EUP)

    # Weighted combine: bf16 products, tiny S-axis reduction, f32 divide.
    num = jnp.sum(ms * w.astype(jnp.bfloat16), axis=0).astype(jnp.float32)
    den = jnp.sum(w, axis=0)                                     # f32
    # NOTE(v7x): if the bundle dump ever shows the single EUP saturating after the
    # HBM cuts, move the sigmoid itself to bf16 as well.
    weighted = num * pl.reciprocal(den + EPS, approx=True)       # EUP reciprocal

    out = (jnp.dot(weighted.astype(jnp.bfloat16), b1_t_ref[...],
                   preferred_element_type=jnp.float32)
           + jnp.dot(f, b2_t_ref[...], preferred_element_type=jnp.float32)
           + bneck_b_ref[...])                                   # (T, PO) f32
    o_ref[...] = jnp.maximum(out, 0.0).astype(o_ref.dtype)


# ----------------------------- tiling helpers ------------------------------ #

def _round_up(x, m):
    return (x + m - 1) // m * m


def _tpu_memory_and_cores():
    """Best-effort chip query: (per-core VMEM bytes, TensorCores per chip)."""
    vmem_cap = 64 * 1024 * 1024      # conservative default (v7x per-TC VMEM)
    num_cores = 1                    # conservative default (v5e/v6e: 1 TC)
    try:
        info = pltpu.get_tpu_info()
        vmem_cap = int(getattr(info, "vmem_capacity_bytes", vmem_cap))
        for attr in ("num_cores", "tensorcore_count",
                     "num_tensorcores", "cores_per_chip"):
            v = getattr(info, attr, None)
            if v:
                num_cores = int(v)
                break
    except Exception:
        pass
    if num_cores == 1:
        try:
            v = getattr(jax.devices()[0], "num_cores", None)
            if v:
                num_cores = int(v)
        except Exception:
            pass
    return vmem_cap, num_cores


def _pick_tiling(n_pix, pack, S, C, O, *, vmem_budget, max_rows, num_cores):
    """Pick packed-row tile + padded row count from a rough VMEM model."""
    PC, PO = pack * C, pack * O
    bytes_per_row = (
        2 * PC * 2            # f tile (bf16), double buffered
        + 2 * S * PC * 2      # ms tile (bf16), double buffered
        + 2 * PO * 4          # out tile (f32), double buffered
        + 3 * S * PC * 2      # bf16 temporaries: contrast, w_bf, products
        + 2 * S * PC * 4      # f32 temporaries: pre-sigmoid matmul out, w
        + 4 * PC * 4          # num / den / weighted (+ slack)
        + 3 * PO * 4)         # bottleneck accumulators / out temporaries
    cap = max(64, (vmem_budget // bytes_per_row) // 64 * 64)
    tile = int(min(max_rows, cap))
    rows = _round_up(n_pix, pack) // pack
    if rows <= tile:
        tile = max(8, _round_up(rows, 8))
        rows_padded = tile
    else:
        rows_padded = _round_up(rows, tile)
        n_tiles = rows_padded // tile
        # Only balance the grid across TensorCores on multi-TC parts (v7x);
        # on single-TC v5e/v6e an extra tile is pure wasted DMA + compute.
        if num_cores > 1 and (n_tiles % num_cores) != 0:
            rows_padded += (num_cores - n_tiles % num_cores) * tile
    return tile, rows_padded


# ----------------------------- Pallas wrapper ------------------------------ #

def _contextual_pallas(f_buf, ms_buf, wnet_w, wnet_b, bneck_w, bneck_b,
                       *, P, tile, vmem_limit, out_dtype):
    """f_buf: (rows_pad, P*C) bf16, ms_buf: (S, rows_pad, P*C) bf16."""
    rows_padded, PC = f_buf.shape
    S = ms_buf.shape[0]
    C = PC // P
    O = bneck_b.shape[0]
    PO = P * O

    # Block-diagonal / tiled weights matching the packed-pixel layout (bf16 on
    # the MXU; biases stay f32 so the accumulate path is f32).
    eye = jnp.eye(P, dtype=jnp.float32)
    wnet_t = jnp.kron(eye, jnp.transpose(wnet_w.reshape(C, C))
                      ).astype(jnp.bfloat16)                       # (PC, PC)
    wnet_b2 = jnp.tile(wnet_b.reshape(1, C), (1, P)).astype(jnp.float32)
    bneck2d = bneck_w.reshape(O, 2 * C)
    b1_t = jnp.kron(eye, jnp.transpose(bneck2d[:, :C])).astype(jnp.bfloat16)
    b2_t = jnp.kron(eye, jnp.transpose(bneck2d[:, C:])).astype(jnp.bfloat16)
    bneck_b2 = jnp.tile(bneck_b.reshape(1, O), (1, P)).astype(jnp.float32)

    grid = (rows_padded // tile,)
    out_packed = pl.pallas_call(
        _contextual_kernel,
        out_shape=jax.ShapeDtypeStruct((rows_padded, PO), out_dtype),
        grid_spec=pltpu.PrefetchScalarGridSpec(
            num_scalar_prefetch=0,
            grid=grid,
            in_specs=[
                pl.BlockSpec((tile, PC), lambda i: (i, 0)),        # features
                pl.BlockSpec((S, tile, PC), lambda i: (0, i, 0)),  # multi-scale
                pl.BlockSpec((PC, PC), lambda i: (0, 0)),          # constants:
                pl.BlockSpec((1, PC), lambda i: (0, 0)),           #   fetched once
                pl.BlockSpec((PC, PO), lambda i: (0, 0)),          #   (block index
                pl.BlockSpec((PC, PO), lambda i: (0, 0)),          #    never changes)
                pl.BlockSpec((1, PO), lambda i: (0, 0)),
            ],
            out_specs=pl.BlockSpec((tile, PO), lambda i: (i, 0)),
        ),
        compiler_params=pltpu.CompilerParams(
            dimension_semantics=("parallel",),
            vmem_limit_bytes=vmem_limit),
    )(f_buf, ms_buf, wnet_t, wnet_b2, b1_t, b2_t, bneck_b2)
    return out_packed


# ------------------------------- JAX glue ---------------------------------- #

def _adaptive_pool_matrix(n, s):
    """(s, n) matrix replicating PyTorch AdaptiveAvgPool along one axis."""
    P = np.zeros((s, n), dtype=np.float32)
    for i in range(s):
        start = (i * n) // s
        end = ((i + 1) * n + s - 1) // s
        P[i, start:end] = 1.0 / (end - start)
    return P


def _bilinear_matrix(n, s):
    """(n, s) matrix for bilinear upsample s -> n with align_corners=True."""
    U = np.zeros((n, s), dtype=np.float32)
    if s == 1:
        U[:, 0] = 1.0
        return U
    for y in range(n):
        src = y * (s - 1) / (n - 1)
        k0 = min(int(np.floor(src)), s - 1)
        k1 = min(k0 + 1, s - 1)
        frac = src - k0
        U[y, k0] += 1.0 - frac
        U[y, k1] += frac
    return U


def contextual_module_forward(x, params, sizes=(1, 2, 3, 6), *,
                              return_nhwc=False, out_dtype=jnp.float32):
    """x: (B, C, H, W) NCHW float32. Returns (B, O, H, W) (or NHWC if asked)."""
    B, C, H, W = x.shape
    O = params["bneck_b"].shape[0]
    S = len(sizes)
    N = B * H * W

    # Packed-pixel layout parameters + generation-gated tiling.
    P = 128 // math.gcd(C, 128)
    PC = P * C
    vmem_cap, num_cores = _tpu_memory_and_cores()
    if vmem_cap <= 64 * 1024 * 1024:          # v7x-class: 64 MiB per TensorCore
        vmem_limit, tile_budget = 48 * 1024 * 1024, 24 * 1024 * 1024
    else:                                     # v5e / v6e: 128 MiB
        vmem_limit, tile_budget = 96 * 1024 * 1024, 40 * 1024 * 1024
    tile, rows_padded = _pick_tiling(N, P, S, C, O,
                                     vmem_budget=tile_budget,
                                     max_rows=8192,
                                     num_cores=num_cores)
    rows = -(-N // P)

    # One NCHW -> NHWC transpose of the (small) feature tensor; everything
    # downstream is emitted directly in the packed pixel-major layout.
    x_nhwc = jnp.transpose(x, (0, 2, 3, 1))                       # (B, H, W, C)

    def pack_rows(a2d):
        """(N, C) -> (rows, P*C) bf16, padding the last partial row if needed."""
        a = a2d.astype(jnp.bfloat16)
        if N != rows * P:
            a = jnp.pad(a, ((0, rows * P - N), (0, 0)))
        return a.reshape(rows, PC)

    # Features: bf16 stream, written once into the padded packed buffer.
    f_buf = jnp.zeros((rows_padded, PC), jnp.bfloat16)
    f_buf = f_buf.at[:rows].set(pack_rows(x_nhwc.reshape(N, C)))

    # Multi-scale maps: each scale's upsample is cast to bf16 in its producing
    # einsum's epilogue and written directly into the pre-allocated, already
    # padded packed buffer (no stack / cast / pad passes over the big tensor).
    ms_buf = jnp.zeros((S, rows_padded, PC), jnp.bfloat16)
    for s_idx, (size, sw) in enumerate(zip(sizes, params["scale_weights"])):
        Ph = jnp.asarray(_adaptive_pool_matrix(H, size))
        Pw = jnp.asarray(_adaptive_pool_matrix(W, size))
        pooled = jnp.einsum('ih,jw,bhwc->bijc', Ph, Pw, x_nhwc)   # adaptive pool
        conv = jnp.einsum('oc,bijc->bijo', sw.reshape(C, C), pooled)  # 1x1 conv
        Uh = jnp.asarray(_bilinear_matrix(H, size))
        Uw = jnp.asarray(_bilinear_matrix(W, size))
        up = jnp.einsum('yi,xj,bijo->byxo', Uh, Uw, conv)         # bilinear up
        ms_buf = ms_buf.at[s_idx, :rows].set(pack_rows(up.reshape(N, C)))

    out_packed = _contextual_pallas(
        f_buf, ms_buf,
        params["wnet_w"], params["wnet_b"],
        params["bneck_w"], params["bneck_b"],
        P=P, tile=tile, vmem_limit=vmem_limit, out_dtype=out_dtype)

    # Padded tail rows contain relu(tiled bias) garbage (den > 0, no NaN) and are
    # sliced off here — keep this slice if the layout ever changes.
    out_flat = out_packed.reshape(rows_padded * P, O)[:N]
    out_nhwc = out_flat.reshape(B, H, W, O)
    if return_nhwc:
        return out_nhwc          # saves a full read+write of the output in HBM
    return jnp.transpose(out_nhwc, (0, 3, 1, 2))


def _reference_forward(x, params, sizes=(1, 2, 3, 6)):
    """Pure-JAX f32 reference of the same math (for a sanity check)."""
    B, C, H, W = x.shape
    O = params["bneck_b"].shape[0]
    multi, weights = [], []
    for size, sw in zip(sizes, params["scale_weights"]):
        Ph = jnp.asarray(_adaptive_pool_matrix(H, size))
        Pw = jnp.asarray(_adaptive_pool_matrix(W, size))
        pooled = jnp.einsum('ih,bchw,jw->bcij', Ph, x, Pw)
        conv = jnp.einsum('oc,bcij->boij', sw.reshape(C, C), pooled)
        Uh = jnp.asarray(_bilinear_matrix(H, size))
        Uw = jnp.asarray(_bilinear_matrix(W, size))
        up = jnp.einsum('hi,boij,wj->bohw', Uh, conv, Uw)
        multi.append(up)
        contrast = x - up
        w = jax.nn.sigmoid(
            jnp.einsum('oc,bchw->bohw', params["wnet_w"].reshape(C, C), contrast)
            + params["wnet_b"][None, :, None, None])
        weights.append(w)
    num = sum(m * w for m, w in zip(multi, weights))
    den = sum(weights) + EPS
    weighted = num / den
    overall = jnp.concatenate([weighted, x], axis=1)
    bottle = (jnp.einsum('oc,bchw->bohw', params["bneck_w"].reshape(O, 2 * C), overall)
              + params["bneck_b"][None, :, None, None])
    return jnp.maximum(bottle, 0.0)


# --------------------------------- main ------------------------------------ #

if __name__ == "__main__":
    B, C, H, W = 2, 32, 16, 16
    O = 64
    sizes = (1, 2, 3, 6)

    key = jax.random.PRNGKey(0)
    keys = jax.random.split(key, 6 + len(sizes))

    params = {
        "scale_weights": [
            0.1 * jax.random.normal(keys[i], (C, C, 1, 1), jnp.float32)
            for i in range(len(sizes))
        ],
        "wnet_w": 0.1 * jax.random.normal(keys[4], (C, C, 1, 1), jnp.float32),
        "wnet_b": 0.1 * jax.random.normal(keys[5], (C,), jnp.float32),
        "bneck_w": 0.1 * jax.random.normal(keys[6], (O, 2 * C, 1, 1), jnp.float32),
        "bneck_b": 0.1 * jax.random.normal(keys[7], (O,), jnp.float32),
    }

    x = jax.random.normal(keys[8], (B, C, H, W), jnp.float32)

    fwd = jax.jit(lambda xx, pp: contextual_module_forward(xx, pp, sizes))
    out = jax.block_until_ready(fwd(x, params))

    ref = jax.block_until_ready(_reference_forward(x, params, sizes))
    # bf16 feature / multi-scale / weight streams + approximate reciprocal:
    # the hot path is intentionally low precision, so compare loosely.
    np.testing.assert_allclose(np.asarray(out), np.asarray(ref),
                               rtol=3e-2, atol=3e-2)

    assert out.shape == (B, O, H, W)
    print("KERNEL_OK")
</pallas_src>

<mosaic_0001>
module attributes {stable_mosaic.version = 11 : i64} {
  func.func @_contextual_kernel(%arg0: i32, %arg1: memref<128x128xbf16, #tpu.memory_space<vmem>>, %arg2: memref<4x128x128xbf16, #tpu.memory_space<vmem>>, %arg3: memref<128x128xbf16, #tpu.memory_space<vmem>>, %arg4: memref<1x128xf32, #tpu.memory_space<vmem>>, %arg5: memref<128x256xbf16, #tpu.memory_space<vmem>>, %arg6: memref<128x256xbf16, #tpu.memory_space<vmem>>, %arg7: memref<1x256xf32, #tpu.memory_space<vmem>>, %arg8: memref<128x256xf32, #tpu.memory_space<vmem>>) attributes {dimension_semantics = [#tpu.dimension_semantics<parallel>], iteration_bounds = array<i64: 1>, scalar_prefetch = 0 : i64, scratch_operands = 0 : i64, tpu.core_type = #tpu.core_type<tc>, window_params = [{transform_indices = @transform_0, window_bounds = array<i64: 128, 128>}, {transform_indices = @transform_1, window_bounds = array<i64: 4, 128, 128>}, {pipeline_mode = #tpu.pipeline_mode<synchronous>, transform_indices = @transform_2, window_bounds = array<i64: 128, 128>}, {pipeline_mode = #tpu.pipeline_mode<synchronous>, transform_indices = @transform_3, window_bounds = array<i64: 1, 128>}, {pipeline_mode = #tpu.pipeline_mode<synchronous>, transform_indices = @transform_4, window_bounds = array<i64: 128, 256>}, {pipeline_mode = #tpu.pipeline_mode<synchronous>, transform_indices = @transform_5, window_bounds = array<i64: 128, 256>}, {pipeline_mode = #tpu.pipeline_mode<synchronous>, transform_indices = @transform_6, window_bounds = array<i64: 1, 256>}, {transform_indices = @transform_7, window_bounds = array<i64: 128, 256>}]} {
    %c0 = arith.constant 0 : index
    %c0_0 = arith.constant 0 : index
    %0 = vector.load %arg1[%c0, %c0_0] : memref<128x128xbf16, #tpu.memory_space<vmem>>, vector<128x128xbf16>
    %c0_1 = arith.constant 0 : index
    %c0_2 = arith.constant 0 : index
    %c0_3 = arith.constant 0 : index
    %1 = vector.load %arg2[%c0_1, %c0_2, %c0_3] : memref<4x128x128xbf16, #tpu.memory_space<vmem>>, vector<4x128x128xbf16>
    %2 = vector.shape_cast %0 : vector<128x128xbf16> to vector<1x128x128xbf16>
    %3 = vector.broadcast %2 : vector<1x128x128xbf16> to vector<4x128x128xbf16>
    %4 = arith.subf %3, %1 : vector<4x128x128xbf16>
    %5 = vector.shape_cast %4 : vector<4x128x128xbf16> to vector<512x128xbf16>
    %c0_4 = arith.constant 0 : index
    %c0_5 = arith.constant 0 : index
    %6 = vector.load %arg3[%c0_4, %c0_5] : memref<128x128xbf16, #tpu.memory_space<vmem>>, vector<128x128xbf16>
    %cst = arith.constant dense<0.000000e+00> : vector<512x128xf32>
    %7 = tpu.matmul %5, %6, %cst {dimension_numbers = #tpu.dot_dimension_numbers<[1], [0], [0], [1], [0, 0, 1, 1], [], []>} : vector<512x128xbf16>, vector<128x128xbf16>, vector<512x128xf32> -> vector<512x128xf32>
    %c0_6 = arith.constant 0 : index
    %c0_7 = arith.constant 0 : index
    %8 = vector.load %arg4[%c0_6, %c0_7] : memref<1x128xf32, #tpu.memory_space<vmem>>, vector<1x128xf32>
    %9 = vector.broadcast %8 : vector<1x128xf32> to vector<512x128xf32>
    %10 = arith.addf %7, %9 : vector<512x128xf32>
    %11 = arith.negf %10 : vector<512x128xf32>
    %12 = math.exp %11 : vector<512x128xf32>
    %cst_8 = arith.constant 1.000000e+00 : f32
    %13 = vector.broadcast %cst_8 : f32 to vector<512x128xf32>
    %14 = arith.addf %13, %12 : vector<512x128xf32>
    %15 = arith.divf %13, %14 : vector<512x128xf32>
    %16 = vector.shape_cast %15 : vector<512x128xf32> to vector<4x128x128xf32>
    %17 = arith.truncf %16 : vector<4x128x128xf32> to vector<4x128x128xbf16>
    %18 = arith.mulf %1, %17 : vector<4x128x128xbf16>
    %19 = arith.extf %18 : vector<4x128x128xbf16> to vector<4x128x128xf32>
    %cst_9 = arith.constant dense<0.000000e+00> : vector<128x128xf32>
    %20 = vector.multi_reduction <add>, %19, %cst_9 [0] : vector<4x128x128xf32> to vector<128x128xf32>
    %21 = arith.truncf %20 : vector<128x128xf32> to vector<128x128xbf16>
    %22 = arith.extf %21 : vector<128x128xbf16> to vector<128x128xf32>
    %cst_10 = arith.constant dense<0.000000e+00> : vector<128x128xf32>
    %23 = vector.multi_reduction <add>, %16, %cst_10 [0] : vector<4x128x128xf32> to vector<128x128xf32>
    %cst_11 = arith.constant 9.99999997E-7 : f32
    %24 = vector.broadcast %cst_11 : f32 to vector<128x128xf32>
    %25 = arith.addf %23, %24 : vector<128x128xf32>
    %26 = tpu.reciprocal %25 {approx = true} : vector<128x128xf32> -> vector<128x128xf32>
    %27 = arith.mulf %22, %26 : vector<128x128xf32>
    %28 = arith.truncf %27 : vector<128x128xf32> to vector<128x128xbf16>
    %c0_12 = arith.constant 0 : index
    %c0_13 = arith.constant 0 : index
    %29 = vector.load %arg5[%c0_12, %c0_13] : memref<128x256xbf16, #tpu.memory_space<vmem>>, vector<128x256xbf16>
    %cst_14 = arith.constant dense<0.000000e+00> : vector<128x256xf32>
    %30 = tpu.matmul %28, %29, %cst_14 {dimension_numbers = #tpu.dot_dimension_numbers<[1], [0], [0], [1], [0, 0, 1, 1], [], []>} : vector<128x128xbf16>, vector<128x256xbf16>, vector<128x256xf32> -> vector<128x256xf32>
    %c0_15 = arith.constant 0 : index
    %c0_16 = arith.constant 0 : index
    %31 = vector.load %arg6[%c0_15, %c0_16] : memref<128x256xbf16, #tpu.memory_space<vmem>>, vector<128x256xbf16>
    %cst_17 = arith.constant dense<0.000000e+00> : vector<128x256xf32>
    %32 = tpu.matmul %0, %31, %cst_17 {dimension_numbers = #tpu.dot_dimension_numbers<[1], [0], [0], [1], [0, 0, 1, 1], [], []>} : vector<128x128xbf16>, vector<128x256xbf16>, vector<128x256xf32> -> vector<128x256xf32>
    %33 = arith.addf %30, %32 : vector<128x256xf32>
    %c0_18 = arith.constant 0 : index
    %c0_19 = arith.constant 0 : index
    %34 = vector.load %arg7[%c0_18, %c0_19] : memref<1x256xf32, #tpu.memory_space<vmem>>, vector<1x256xf32>
    %35 = vector.broadcast %34 : vector<1x256xf32> to vector<128x256xf32>
    %36 = arith.addf %33, %35 : vector<128x256xf32>
    %cst_20 = arith.constant 0.000000e+00 : f32
    %37 = vector.broadcast %cst_20 : f32 to vector<128x256xf32>
    %38 = arith.maximumf %36, %37 : vector<128x256xf32>
    %c0_21 = arith.constant 0 : index
    %c0_22 = arith.constant 0 : index
    %39 = vector.load %arg8[%c0_21, %c0_22] : memref<128x256xf32, #tpu.memory_space<vmem>>, vector<128x256xf32>
    tpu.vector_store %arg8[%c0_21, %c0_22], %38 {strides = array<i32>} : memref<128x256xf32, #tpu.memory_space<vmem>>, vector<128x256xf32>,
    return
  }
  func.func @transform_0(%arg0: i32) -> (i32, i32) {
    %c0_i32 = arith.constant 0 : i32
    %c0_i32_0 = arith.constant 0 : i32
    return %arg0, %c0_i32 : i32, i32
  }
  func.func @transform_1(%arg0: i32) -> (i32, i32, i32) {
    %c0_i32 = arith.constant 0 : i32
    %c0_i32_0 = arith.constant 0 : i32
    %c0_i32_1 = arith.constant 0 : i32
    return %c0_i32, %arg0, %c0_i32_0 : i32, i32, i32
  }
  func.func @transform_2(%arg0: i32) -> (i32, i32) {
    %c0_i32 = arith.constant 0 : i32
    %c0_i32_0 = arith.constant 0 : i32
    %c0_i32_1 = arith.constant 0 : i32
    return %c0_i32, %c0_i32_0 : i32, i32
  }
  func.func @transform_3(%arg0: i32) -> (i32, i32) {
    %c0_i32 = arith.constant 0 : i32
    %c0_i32_0 = arith.constant 0 : i32
    %c0_i32_1 = arith.constant 0 : i32
    return %c0_i32, %c0_i32_0 : i32, i32
  }
  func.func @transform_4(%arg0: i32) -> (i32, i32) {
    %c0_i32 = arith.constant 0 : i32
    %c0_i32_0 = arith.constant 0 : i32
    %c0_i32_1 = arith.constant 0 : i32
    return %c0_i32, %c0_i32_0 : i32, i32
  }
  func.func @transform_5(%arg0: i32) -> (i32, i32) {
    %c0_i32 = arith.constant 0 : i32
    %c0_i32_0 = arith.constant 0 : i32
    %c0_i32_1 = arith.constant 0 : i32
    return %c0_i32, %c0_i32_0 : i32, i32
  }
  func.func @transform_6(%arg0: i32) -> (i32, i32) {
    %c0_i32 = arith.constant 0 : i32
    %c0_i32_0 = arith.constant 0 : i32
    %c0_i32_1 = arith.constant 0 : i32
    return %c0_i32, %c0_i32_0 : i32, i32
  }
  func.func @transform_7(%arg0: i32) -> (i32, i32) {
    %c0_i32 = arith.constant 0 : i32
    %c0_i32_0 = arith.constant 0 : i32
    return %arg0, %c0_i32 : i32, i32
  }
}

</mosaic_0001>

<llo_original>
// kernel: _lambda_.1
$region0: #{_lambda_.1}
  #allocation0 [shape = 'u32[]', space=smem, size = 0x4, offset = 0x4, fixed_abs, tag = 'smem constant byte address 0x4 - core index']
  #allocation1 [shape = 'u32[144,128]{1,0:T(1,128)}', space=vmem, size = 0x12000, scoped, tag = 'internal scratch']
  %s0 = inlined_call_operand.vmem [shape: bf16[128,128], index: 0, kind: input, shape index: {}]
  %s1 = inlined_call_operand.vmem [shape: bf16[4,128,128], index: 1, kind: input, shape index: {}]
  %s2 = inlined_call_operand.vmem [shape: bf16[128,128], index: 2, kind: input, shape index: {}]
  %s3 = inlined_call_operand.vmem [shape: f32[1,128], index: 3, kind: input, shape index: {}]
  %s4 = inlined_call_operand.vmem [shape: bf16[128,256], index: 4, kind: input, shape index: {}]
  %s5 = inlined_call_operand.vmem [shape: bf16[128,256], index: 5, kind: input, shape index: {}]
  %s6 = inlined_call_operand.vmem [shape: f32[1,256], index: 6, kind: input, shape index: {}]
  %s7 = inlined_call_operand.vmem [shape: f32[128,256], index: 7, kind: output, shape index: {}]
  %s8 = sld [smem:[#allocation0]]
  $region38: #{_lambda_.1} parent=0
    _
  %s10 = ssub.s32 1, %s8
  %s11 = scalar_select 0, %s10, %s8
  // Predicated region
  $region2: #{_lambda_.1} parent=0 // pred_check
    _
  $region3: #{_lambda_.1} parent=0 // pred_check_branch
    %13 = sbr.rel (0) target = $region5
  $region4: #{_lambda_.1} parent=0 // pred_region
    _
  $region5: #{_lambda_.1} parent=0 // pred_fallthru
    _
  // Predicated region
  $region6: #{_lambda_.1} parent=0 // pred_check
    _
  $region7: #{_lambda_.1} parent=0 // pred_check_branch
    %15 = sbr.rel (0) target = $region9
  $region8: #{_lambda_.1} parent=0 // pred_region
    _
  $region9: #{_lambda_.1} parent=0 // pred_fallthru
    _
  // Predicated region
  $region10: #{_lambda_.1} parent=0 // pred_check
    _
  $region11: #{_lambda_.1} parent=0 // pred_check_branch
    %17 = sbr.rel (0) target = $region13
  $region12: #{_lambda_.1} parent=0 // pred_region
    _
  $region13: #{_lambda_.1} parent=0 // pred_fallthru
    _
  // Predicated region
  $region14: #{_lambda_.1} parent=0 // pred_check
    _
  $region15: #{_lambda_.1} parent=0 // pred_check_branch
    %19 = sbr.rel (0) target = $region17
  $region16: #{_lambda_.1} parent=0 // pred_region
    _
  $region17: #{_lambda_.1} parent=0 // pred_fallthru
    _
  // Predicated region
  $region18: #{_lambda_.1} parent=0 // pred_check
    _
  $region19: #{_lambda_.1} parent=0 // pred_check_branch
    %21 = sbr.rel (0) target = $region21
  $region20: #{_lambda_.1} parent=0 // pred_region
    _
  $region21: #{_lambda_.1} parent=0 // pred_fallthru
    _
  // Predicated region
  $region22: #{_lambda_.1} parent=0 // pred_check
    _
  $region23: #{_lambda_.1} parent=0 // pred_check_branch
    %23 = sbr.rel (0) target = $region25
  $region24: #{_lambda_.1} parent=0 // pred_region
    _
  $region25: #{_lambda_.1} parent=0 // pred_fallthru
    _
  // Predicated region
  $region26: #{_lambda_.1} parent=0 // pred_check
    _
  $region27: #{_lambda_.1} parent=0 // pred_check_branch
    %25 = sbr.rel (0) target = $region29
  $region28: #{_lambda_.1} parent=0 // pred_region
    _
  $region29: #{_lambda_.1} parent=0 // pred_fallthru
    _
  %v27 = vld [vmem:[%s0] sm:$0xf]
  %v28 = vld [vmem:[%s0 + $0x4] sm:$0xf]
  %v29 = vld [vmem:[%s0 + $0x8] sm:$0xf]
  %v30 = vld [vmem:[%s0 + $0xc] sm:$0xf]
  %v31 = vld [vmem:[%s0 + $0x10] sm:$0xf]
  %v32 = vld [vmem:[%s0 + $0x14] sm:$0xf]
  %v33 = vld [vmem:[%s0 + $0x18] sm:$0xf]
  %v34 = vld [vmem:[%s0 + $0x1c] sm:$0xf]
  %v35 = vld [vmem:[%s0 + $0x20] sm:$0xf]
  %v36 = vld [vmem:[%s0 + $0x24] sm:$0xf]
  %v37 = vld [vmem:[%s0 + $0x28] sm:$0xf]
  %v38 = vld [vmem:[%s0 + $0x2c] sm:$0xf]
  %v39 = vld [vmem:[%s0 + $0x30] sm:$0xf]
  %v40 = vld [vmem:[%s0 + $0x34] sm:$0xf]
  %v41 = vld [vmem:[%s0 + $0x38] sm:$0xf]
  %v42 = vld [vmem:[%s0 + $0x3c] sm:$0xf]
  %v43 = vld [vmem:[%s1] sm:$0xf]
  %v44 = vld [vmem:[%s1 + $0x4] sm:$0xf]
  %v45 = vld [vmem:[%s1 + $0x8] sm:$0xf]
  %v46 = vld [vmem:[%s1 + $0xc] sm:$0xf]
  %v47 = vld [vmem:[%s1 + $0x10] sm:$0xf]
  %v48 = vld [vmem:[%s1 + $0x14] sm:$0xf]
  %v49 = vld [vmem:[%s1 + $0x18] sm:$0xf]
  %v50 = vld [vmem:[%s1 + $0x1c] sm:$0xf]
  %v51 = vld [vmem:[%s1 + $0x20] sm:$0xf]
  %v52 = vld [vmem:[%s1 + $0x24] sm:$0xf]
  %v53 = vld [vmem:[%s1 + $0x28] sm:$0xf]
  %v54 = vld [vmem:[%s1 + $0x2c] sm:$0xf]
  %v55 = vld [vmem:[%s1 + $0x30] sm:$0xf]
  %v56 = vld [vmem:[%s1 + $0x34] sm:$0xf]
  %v57 = vld [vmem:[%s1 + $0x38] sm:$0xf]
  %v58 = vld [vmem:[%s1 + $0x3c] sm:$0xf]
  %v59 = vld [vmem:[%s1 + $0x40] sm:$0xf]
  %v60 = vld [vmem:[%s1 + $0x44] sm:$0xf]
  %v61 = vld [vmem:[%s1 + $0x48] sm:$0xf]
  %v62 = vld [vmem:[%s1 + $0x4c] sm:$0xf]
  %v63 = vld [vmem:[%s1 + $0x50] sm:$0xf]
  %v64 = vld [vmem:[%s1 + $0x54] sm:$0xf]
  %v65 = vld [vmem:[%s1 + $0x58] sm:$0xf]
  %v66 = vld [vmem:[%s1 + $0x5c] sm:$0xf]
  %v67 = vld [vmem:[%s1 + $0x60] sm:$0xf]
  %v68 = vld [vmem:[%s1 + $0x64] sm:$0xf]
  %v69 = vld [vmem:[%s1 + $0x68] sm:$0xf]
  %v70 = vld [vmem:[%s1 + $0x6c] sm:$0xf]
  %v71 = vld [vmem:[%s1 + $0x70] sm:$0xf]
  %v72 = vld [vmem:[%s1 + $0x74] sm:$0xf]
  %v73 = vld [vmem:[%s1 + $0x78] sm:$0xf]
  %v74 = vld [vmem:[%s1 + $0x7c] sm:$0xf]
  %v75 = vld [vmem:[%s1 + $0x80] sm:$0xf]
  %v76 = vld [vmem:[%s1 + $0x84] sm:$0xf]
  %v77 = vld [vmem:[%s1 + $0x88] sm:$0xf]
  %v78 = vld [vmem:[%s1 + $0x8c] sm:$0xf]
  %v79 = vld [vmem:[%s1 + $0x90] sm:$0xf]
  %v80 = vld [vmem:[%s1 + $0x94] sm:$0xf]
  %v81 = vld [vmem:[%s1 + $0x98] sm:$0xf]
  %v82 = vld [vmem:[%s1 + $0x9c] sm:$0xf]
  %v83 = vld [vmem:[%s1 + $0xa0] sm:$0xf]
  %v84 = vld [vmem:[%s1 + $0xa4] sm:$0xf]
  %v85 = vld [vmem:[%s1 + $0xa8] sm:$0xf]
  %v86 = vld [vmem:[%s1 + $0xac] sm:$0xf]
  %v87 = vld [vmem:[%s1 + $0xb0] sm:$0xf]
  %v88 = vld [vmem:[%s1 + $0xb4] sm:$0xf]
  %v89 = vld [vmem:[%s1 + $0xb8] sm:$0xf]
  %v90 = vld [vmem:[%s1 + $0xbc] sm:$0xf]
  %v91 = vld [vmem:[%s1 + $0xc0] sm:$0xf]
  %v92 = vld [vmem:[%s1 + $0xc4] sm:$0xf]
  %v93 = vld [vmem:[%s1 + $0xc8] sm:$0xf]
  %v94 = vld [vmem:[%s1 + $0xcc] sm:$0xf]
  %v95 = vld [vmem:[%s1 + $0xd0] sm:$0xf]
  %v96 = vld [vmem:[%s1 + $0xd4] sm:$0xf]
  %v97 = vld [vmem:[%s1 + $0xd8] sm:$0xf]
  %v98 = vld [vmem:[%s1 + $0xdc] sm:$0xf]
  %v99 = vld [vmem:[%s1 + $0xe0] sm:$0xf]
  %v100 = vld [vmem:[%s1 + $0xe4] sm:$0xf]
  %v101 = vld [vmem:[%s1 + $0xe8] sm:$0xf]
  %v102 = vld [vmem:[%s1 + $0xec] sm:$0xf]
  %v103 = vld [vmem:[%s1 + $0xf0] sm:$0xf]
  %v104 = vld [vmem:[%s1 + $0xf4] sm:$0xf]
  %v105 = vld [vmem:[%s1 + $0xf8] sm:$0xf]
  %v106 = vld [vmem:[%s1 + $0xfc] sm:$0xf]
  %v107 = vsub.bf16 %v27, %v43
  %v108 = vsub.bf16 %v28, %v44
  %v109 = vsub.bf16 %v29, %v45
  %v110 = vsub.bf16 %v30, %v46
  %v111 = vsub.bf16 %v31, %v47
  %v112 = vsub.bf16 %v32, %v48
  %v113 = vsub.bf16 %v33, %v49
  %v114 = vsub.bf16 %v34, %v50
  %v115 = vsub.bf16 %v35, %v51
  %v116 = vsub.bf16 %v36, %v52
  %v117 = vsub.bf16 %v37, %v53
  %v118 = vsub.bf16 %v38, %v54
  %v119 = vsub.bf16 %v39, %v55
  %v120 = vsub.bf16 %v40, %v56
  %v121 = vsub.bf16 %v41, %v57
  %v122 = vsub.bf16 %v42, %v58
  %v123 = vsub.bf16 %v27, %v59
  %v124 = vsub.bf16 %v28, %v60
  %v125 = vsub.bf16 %v29, %v61
  %v126 = vsub.bf16 %v30, %v62
  %v127 = vsub.bf16 %v31, %v63
  %v128 = vsub.bf16 %v32, %v64
  %v129 = vsub.bf16 %v33, %v65
  %v130 = vsub.bf16 %v34, %v66
  %v131 = vsub.bf16 %v35, %v67
  %v132 = vsub.bf16 %v36, %v68
  %v133 = vsub.bf16 %v37, %v69
  %v134 = vsub.bf16 %v38, %v70
  %v135 = vsub.bf16 %v39, %v71
  %v136 = vsub.bf16 %v40, %v72
  %v137 = vsub.bf16 %v41, %v73
  %v138 = vsub.bf16 %v42, %v74
  %v139 = vsub.bf16 %v27, %v75
  %v140 = vsub.bf16 %v28, %v76
  %v141 = vsub.bf16 %v29, %v77
  %v142 = vsub.bf16 %v30, %v78
  %v143 = vsub.bf16 %v31, %v79
  %v144 = vsub.bf16 %v32, %v80
  %v145 = vsub.bf16 %v33, %v81
  %v146 = vsub.bf16 %v34, %v82
  %v147 = vsub.bf16 %v35, %v83
  %v148 = vsub.bf16 %v36, %v84
  %v149 = vsub.bf16 %v37, %v85
  %v150 = vsub.bf16 %v38, %v86
  %v151 = vsub.bf16 %v39, %v87
  %v152 = vsub.bf16 %v40, %v88
  %v153 = vsub.bf16 %v41, %v89
  %v154 = vsub.bf16 %v42, %v90
  %v155 = vsub.bf16 %v27, %v91
  %v156 = vsub.bf16 %v28, %v92
  %v157 = vsub.bf16 %v29, %v93
  %v158 = vsub.bf16 %v30, %v94
  %v159 = vsub.bf16 %v31, %v95
  %v160 = vsub.bf16 %v32, %v96
  %v161 = vsub.bf16 %v33, %v97
  %v162 = vsub.bf16 %v34, %v98
  %v163 = vsub.bf16 %v35, %v99
  %v164 = vsub.bf16 %v36, %v100
  %v165 = vsub.bf16 %v37, %v101
  %v166 = vsub.bf16 %v38, %v102
  %v167 = vsub.bf16 %v39, %v103
  %v168 = vsub.bf16 %v40, %v104
  %v169 = vsub.bf16 %v41, %v105
  %v170 = vsub.bf16 %v42, %v106
  %v171 = vld [vmem:[%s2] sm:$0xf]
  %v172 = vld [vmem:[%s2 + $0x4] sm:$0xf]
  %v173 = vld [vmem:[%s2 + $0x8] sm:$0xf]
  %v174 = vld [vmem:[%s2 + $0xc] sm:$0xf]
  %v175 = vld [vmem:[%s2 + $0x10] sm:$0xf]
  %v176 = vld [vmem:[%s2 + $0x14] sm:$0xf]
  %v177 = vld [vmem:[%s2 + $0x18] sm:$0xf]
  %v178 = vld [vmem:[%s2 + $0x1c] sm:$0xf]
  %v179 = vld [vmem:[%s2 + $0x20] sm:$0xf]
  %v180 = vld [vmem:[%s2 + $0x24] sm:$0xf]
  %v181 = vld [vmem:[%s2 + $0x28] sm:$0xf]
  %v182 = vld [vmem:[%s2 + $0x2c] sm:$0xf]
  %v183 = vld [vmem:[%s2 + $0x30] sm:$0xf]
  %v184 = vld [vmem:[%s2 + $0x34] sm:$0xf]
  %v185 = vld [vmem:[%s2 + $0x38] sm:$0xf]
  %v186 = vld [vmem:[%s2 + $0x3c] sm:$0xf]
  %v187 = vld [vmem:[%s3] sm:$0x1]
  %v189 = vlaneseq
  %v190 = vshrl.u32 %v189, 7
  %v191 = vsub.s32 0, %v190
  %v192 = vrot.slane %v187, %v191
  %v258 = vunpack.c.l.b16 %v107
  %v259 = vunpack.c.l.b16 %v108
  %v260 = vunpack.c.l.b16 %v109
  %v261 = vunpack.c.l.b16 %v110
  %v262 = vunpack.c.l.b16 %v111
  %v263 = vunpack.c.l.b16 %v112
  %v264 = vunpack.c.l.b16 %v113
  %v265 = vunpack.c.l.b16 %v114
  %v266 = vunpack.c.l.b16 %v115
  %v267 = vunpack.c.l.b16 %v116
  %v268 = vunpack.c.l.b16 %v117
  %v269 = vunpack.c.l.b16 %v118
  %v270 = vunpack.c.l.b16 %v119
  %v271 = vunpack.c.l.b16 %v120
  %v272 = vunpack.c.l.b16 %v121
  %v273 = vunpack.c.l.b16 %v122
  %v274 = vunpack.c.l.b16 %v123
  %v275 = vunpack.c.l.b16 %v124
  %v276 = vunpack.c.l.b16 %v125
  %v277 = vunpack.c.l.b16 %v126
  %v278 = vunpack.c.l.b16 %v127
  %v279 = vunpack.c.l.b16 %v128
  %v280 = vunpack.c.l.b16 %v129
  %v281 = vunpack.c.l.b16 %v130
  %v282 = vunpack.c.l.b16 %v131
  %v283 = vunpack.c.l.b16 %v132
  %v284 = vunpack.c.l.b16 %v133
  %v285 = vunpack.c.l.b16 %v134
  %v286 = vunpack.c.l.b16 %v135
  %v287 = vunpack.c.l.b16 %v136
  %v288 = vunpack.c.l.b16 %v137
  %v289 = vunpack.c.l.b16 %v138
  %v290 = vunpack.c.l.b16 %v139
  %v291 = vunpack.c.l.b16 %v140
  %v292 = vunpack.c.l.b16 %v141
  %v293 = vunpack.c.l.b16 %v142
  %v294 = vunpack.c.l.b16 %v143
  %v295 = vunpack.c.l.b16 %v144
  %v296 = vunpack.c.l.b16 %v145
  %v297 = vunpack.c.l.b16 %v146
  %v298 = vunpack.c.l.b16 %v147
  %v299 = vunpack.c.l.b16 %v148
  %v300 = vunpack.c.l.b16 %v149
  %v301 = vunpack.c.l.b16 %v150
  %v302 = vunpack.c.l.b16 %v151
  %v303 = vunpack.c.l.b16 %v152
  %v304 = vunpack.c.l.b16 %v153
  %v305 = vunpack.c.l.b16 %v154
  %v306 = vunpack.c.l.b16 %v155
  %v307 = vunpack.c.l.b16 %v156
  %v308 = vunpack.c.l.b16 %v157
  %v309 = vunpack.c.l.b16 %v158
  %v310 = vunpack.c.l.b16 %v159
  %v311 = vunpack.c.l.b16 %v160
  %v312 = vunpack.c.l.b16 %v161
  %v313 = vunpack.c.l.b16 %v162
  %v314 = vunpack.c.l.b16 %v163
  %v315 = vunpack.c.l.b16 %v164
  %v316 = vunpack.c.l.b16 %v165
  %v317 = vunpack.c.l.b16 %v166
  %v318 = vunpack.c.l.b16 %v167
  %v319 = vunpack.c.l.b16 %v168
  %v320 = vunpack.c.l.b16 %v169
  %v321 = vunpack.c.l.b16 %v170
  %v322 = vpack.c.b16 %v259, %v258
  %v323 = vpack.c.b16 %v261, %v260
  %v324 = vpack.c.b16 %v263, %v262
  %v325 = vpack.c.b16 %v265, %v264
  %v326 = vpack.c.b16 %v267, %v266
  %v327 = vpack.c.b16 %v269, %v268
  %v328 = vpack.c.b16 %v271, %v270
  %v329 = vpack.c.b16 %v273, %v272
  %v330 = vpack.c.b16 %v275, %v274
  %v331 = vpack.c.b16 %v277, %v276
  %v332 = vpack.c.b16 %v279, %v278
  %v333 = vpack.c.b16 %v281, %v280
  %v334 = vpack.c.b16 %v283, %v282
  %v335 = vpack.c.b16 %v285, %v284
  %v336 = vpack.c.b16 %v287, %v286
  %v337 = vpack.c.b16 %v289, %v288
  %v338 = vpack.c.b16 %v291, %v290
  %v339 = vpack.c.b16 %v293, %v292
  %v340 = vpack.c.b16 %v295, %v294
  %v341 = vpack.c.b16 %v297, %v296
  %v342 = vpack.c.b16 %v299, %v298
  %v343 = vpack.c.b16 %v301, %v300
  %v344 = vpack.c.b16 %v303, %v302
  %v345 = vpack.c.b16 %v305, %v304
  %v346 = vpack.c.b16 %v307, %v306
  %v347 = vpack.c.b16 %v309, %v308
  %v348 = vpack.c.b16 %v311, %v310
  %v349 = vpack.c.b16 %v313, %v312
  %v350 = vpack.c.b16 %v315, %v314
  %v351 = vpack.c.b16 %v317, %v316
  %v352 = vpack.c.b16 %v319, %v318
  %v353 = vpack.c.b16 %v321, %v320
  %v402 = vunpack.c.l.b16 %v171
  %v403 = vunpack.c.l.b16 %v172
  %v404 = vunpack.c.l.b16 %v173
  %v405 = vunpack.c.l.b16 %v174
  %v406 = vunpack.c.l.b16 %v175
  %v407 = vunpack.c.l.b16 %v176
  %v408 = vunpack.c.l.b16 %v177
  %v409 = vunpack.c.l.b16 %v178
  %v410 = vunpack.c.l.b16 %v179
  %v411 = vunpack.c.l.b16 %v180
  %v412 = vunpack.c.l.b16 %v181
  %v413 = vunpack.c.l.b16 %v182
  %v414 = vunpack.c.l.b16 %v183
  %v415 = vunpack.c.l.b16 %v184
  %v416 = vunpack.c.l.b16 %v185
  %v417 = vunpack.c.l.b16 %v186
  %v418 = vpack.c.b16 %v403, %v402
  %v419 = vpack.c.b16 %v405, %v404
  %v420 = vpack.c.b16 %v407, %v406
  %v421 = vpack.c.b16 %v409, %v408
  %v422 = vpack.c.b16 %v411, %v410
  %v423 = vpack.c.b16 %v413, %v412
  %v424 = vpack.c.b16 %v415, %v414
  %v425 = vpack.c.b16 %v417, %v416
  %434 = vmatprep.subr.bf16.mxu0 0
  %435 = vmatpush1.bf16.msra.mxu0 %v418
  %436 = vmatprep.subr.bf16.mxu0 0
  %437 = vmatpush1.bf16.msra.mxu0 %v419
  %438 = vmatprep.subr.bf16.mxu0 0
  %439 = vmatpush1.bf16.msra.mxu0 %v420
  %440 = vmatprep.subr.bf16.mxu0 0
  %441 = vmatpush1.bf16.msra.mxu0 %v421
  %442 = vmatprep.subr.bf16.mxu0 0
  %443 = vmatpush1.bf16.msra.mxu0 %v422
  %444 = vmatprep.subr.bf16.mxu0 0
  %445 = vmatpush1.bf16.msra.mxu0 %v423
  %446 = vmatprep.subr.bf16.mxu0 0
  %447 = vmatpush1.bf16.msra.mxu0 %v424
  %448 = vmatprep.subr.bf16.mxu0 0
  %449 = vmatpush1.bf16.msra.mxu0 %v425
  %450 = vmatprep.subr.bf16.mxu0 0
  %451 = vmatpush1.bf16.msra.mxu0 0
  %452 = vmatprep.subr.bf16.mxu0 0
  %453 = vmatpush1.bf16.msra.mxu0 0
  %454 = vmatprep.subr.bf16.mxu0 0
  %455 = vmatpush1.bf16.msra.mxu0 0
  %456 = vmatprep.subr.bf16.mxu0 0
  %457 = vmatpush1.bf16.msra.mxu0 0
  %458 = vmatprep.subr.bf16.mxu0 0
  %459 = vmatpush1.bf16.msra.mxu0 0
  %460 = vmatprep.subr.bf16.mxu0 0
  %461 = vmatpush1.bf16.msra.mxu0 0
  %462 = vmatprep.subr.bf16.mxu0 0
  %463 = vmatpush1.bf16.msra.mxu0 0
  %464 = vmatprep.subr.bf16.mxu0 0
  %465 = vmatpush1.bf16.msra.mxu0 0
  %466 = vmatprep.mubr.bf16.mxu0 0
  %467 = vmatmul.mubr.bf16.gmra.mrb[0].mxu0 %v322
  %v468 = vpop.f32.mrb[0].mxu0
  %v469 = vadd.f32 %v192, %v468
  %v470 = vpop.f32.mrb[0].mxu0
  %v471 = vpop.f32.mrb[0].mxu0
  %v472 = vadd.f32 %v192, %v471
  %v473 = vpop.f32.mrb[0].mxu0
  %474 = vmatprep.mubr.bf16.mxu0 0
  %475 = vmatmul.mubr.bf16.gmra.mrb[0].mxu0 %v323
  %v476 = vpop.f32.mrb[0].mxu0
  %v477 = vadd.f32 %v192, %v476
  %v478 = vpop.f32.mrb[0].mxu0
  %v479 = vpop.f32.mrb[0].mxu0
  %v480 = vadd.f32 %v192, %v479
  %v481 = vpop.f32.mrb[0].mxu0
  %482 = vmatprep.mubr.bf16.mxu0 0
  %483 = vmatmul.mubr.bf16.gmra.mrb[0].mxu0 %v324
  %v484 = vpop.f32.mrb[0].mxu0
  %v485 = vadd.f32 %v192, %v484
  %v486 = vpop.f32.mrb[0].mxu0
  %v487 = vpop.f32.mrb[0].mxu0
  %v488 = vadd.f32 %v192, %v487
  %v489 = vpop.f32.mrb[0].mxu0
  %490 = vmatprep.mubr.bf16.mxu0 0
  %491 = vmatmul.mubr.bf16.gmra.mrb[0].mxu0 %v325
  %v492 = vpop.f32.mrb[0].mxu0
  %v493 = vadd.f32 %v192, %v492
  %v494 = vpop.f32.mrb[0].mxu0
  %v495 = vpop.f32.mrb[0].mxu0
  %v496 = vadd.f32 %v192, %v495
  %v497 = vpop.f32.mrb[0].mxu0
  %498 = vmatprep.mubr.bf16.mxu0 0
  %499 = vmatmul.mubr.bf16.gmra.mrb[0].mxu0 %v326
  %v500 = vpop.f32.mrb[0].mxu0
  %v501 = vadd.f32 %v192, %v500
  %v502 = vpop.f32.mrb[0].mxu0
  %v503 = vpop.f32.mrb[0].mxu0
  %v504 = vadd.f32 %v192, %v503
  %v505 = vpop.f32.mrb[0].mxu0
  %506 = vmatprep.mubr.bf16.mxu0 0
  %507 = vmatmul.mubr.bf16.gmra.mrb[0].mxu0 %v327
  %v508 = vpop.f32.mrb[0].mxu0
  %v509 = vadd.f32 %v192, %v508
  %v510 = vpop.f32.mrb[0].mxu0
  %v511 = vpop.f32.mrb[0].mxu0
  %v512 = vadd.f32 %v192, %v511
  %v513 = vpop.f32.mrb[0].mxu0
  %514 = vmatprep.mubr.bf16.mxu0 0
  %515 = vmatmul.mubr.bf16.gmra.mrb[0].mxu0 %v328
  %v516 = vpop.f32.mrb[0].mxu0
  %v517 = vadd.f32 %v192, %v516
  %v518 = vpop.f32.mrb[0].mxu0
  %v519 = vpop.f32.mrb[0].mxu0
  %v520 = vadd.f32 %v192, %v519
  %v521 = vpop.f32.mrb[0].mxu0
  %522 = vmatprep.mubr.bf16.mxu0 0
  %523 = vmatmul.mubr.bf16.gmra.mrb[0].mxu0 %v329
  %v524 = vpop.f32.mrb[0].mxu0
  %v525 = vadd.f32 %v192, %v524
  %v526 = vpop.f32.mrb[0].mxu0
  %v527 = vpop.f32.mrb[0].mxu0
  %v528 = vadd.f32 %v192, %v527
  %v529 = vpop.f32.mrb[0].mxu0
  %530 = vmatprep.mubr.bf16.mxu0 0
  %531 = vmatmul.mubr.bf16.gmra.mrb[0].mxu0 %v330
  %v532 = vpop.f32.mrb[0].mxu0
  %v533 = vadd.f32 %v192, %v532
  %v534 = vpop.f32.mrb[0].mxu0
  %v535 = vpop.f32.mrb[0].mxu0
  %v536 = vadd.f32 %v192, %v535
  %v537 = vpop.f32.mrb[0].mxu0
  %538 = vmatprep.mubr.bf16.mxu0 0
  %539 = vmatmul.mubr.bf16.gmra.mrb[0].mxu0 %v331
  %v540 = vpop.f32.mrb[0].mxu0
  %v541 = vadd.f32 %v192, %v540
  %v542 = vpop.f32.mrb[0].mxu0
  %v543 = vpop.f32.mrb[0].mxu0
  %v544 = vadd.f32 %v192, %v543
  %v545 = vpop.f32.mrb[0].mxu0
  %546 = vmatprep.mubr.bf16.mxu0 0
  %547 = vmatmul.mubr.bf16.gmra.mrb[0].mxu0 %v332
  %v548 = vpop.f32.mrb[0].mxu0
  %v549 = vadd.f32 %v192, %v548
  %v550 = vpop.f32.mrb[0].mxu0
  %v551 = vpop.f32.mrb[0].mxu0
  %v552 = vadd.f32 %v192, %v551
  %v553 = vpop.f32.mrb[0].mxu0
  %554 = vmatprep.mubr.bf16.mxu0 0
  %555 = vmatmul.mubr.bf16.gmra.mrb[0].mxu0 %v333
  %v556 = vpop.f32.mrb[0].mxu0
  %v557 = vadd.f32 %v192, %v556
  %v558 = vpop.f32.mrb[0].mxu0
  %v559 = vpop.f32.mrb[0].mxu0
  %v560 = vadd.f32 %v192, %v559
  %v561 = vpop.f32.mrb[0].mxu0
  %562 = vmatprep.mubr.bf16.mxu0 0
  %563 = vmatmul.mubr.bf16.gmra.mrb[0].mxu0 %v334
  %v564 = vpop.f32.mrb[0].mxu0
  %v565 = vadd.f32 %v192, %v564
  %v566 = vpop.f32.mrb[0].mxu0
  %v567 = vpop.f32.mrb[0].mxu0
  %v568 = vadd.f32 %v192, %v567
  %v569 = vpop.f32.mrb[0].mxu0
  %570 = vmatprep.mubr.bf16.mxu0 0
  %571 = vmatmul.mubr.bf16.gmra.mrb[0].mxu0 %v335
  %v572 = vpop.f32.mrb[0].mxu0
  %v573 = vadd.f32 %v192, %v572
  %v574 = vpop.f32.mrb[0].mxu0
  %v575 = vpop.f32.mrb[0].mxu0
  %v576 = vadd.f32 %v192, %v575
  %v577 = vpop.f32.mrb[0].mxu0
  %578 = vmatprep.mubr.bf16.mxu0 0
  %579 = vmatmul.mubr.bf16.gmra.mrb[0].mxu0 %v336
  %v580 = vpop.f32.mrb[0].mxu0
  %v581 = vadd.f32 %v192, %v580
  %v582 = vpop.f32.mrb[0].mxu0
  %v583 = vpop.f32.mrb[0].mxu0
  %v584 = vadd.f32 %v192, %v583
  %v585 = vpop.f32.mrb[0].mxu0
  %586 = vmatprep.mubr.bf16.mxu0 0
  %587 = vmatmul.mubr.bf16.gmra.mrb[0].mxu0 %v337
  %v588 = vpop.f32.mrb[0].mxu0
  %v589 = vadd.f32 %v192, %v588
  %v590 = vpop.f32.mrb[0].mxu0
  %v591 = vpop.f32.mrb[0].mxu0
  %v592 = vadd.f32 %v192, %v591
  %v593 = vpop.f32.mrb[0].mxu0
  %594 = vmatprep.mubr.bf16.mxu0 0
  %595 = vmatmul.mubr.bf16.gmra.mrb[0].mxu0 %v338
  %v596 = vpop.f32.mrb[0].mxu0
  %v597 = vadd.f32 %v192, %v596
  %v598 = vpop.f32.mrb[0].mxu0
  %v599 = vpop.f32.mrb[0].mxu0
  %v600 = vadd.f32 %v192, %v599
  %v601 = vpop.f32.mrb[0].mxu0
  %602 = vmatprep.mubr.bf16.mxu0 0
  %603 = vmatmul.mubr.bf16.gmra.mrb[0].mxu0 %v339
  %v604 = vpop.f32.mrb[0].mxu0
  %v605 = vadd.f32 %v192, %v604
  %v606 = vpop.f32.mrb[0].mxu0
  %v607 = vpop.f32.mrb[0].mxu0
  %v608 = vadd.f32 %v192, %v607
  %v609 = vpop.f32.mrb[0].mxu0
  %610 = vmatprep.mubr.bf16.mxu0 0
  %611 = vmatmul.mubr.bf16.gmra.mrb[0].mxu0 %v340
  %v612 = vpop.f32.mrb[0].mxu0
  %v613 = vadd.f32 %v192, %v612
  %v614 = vpop.f32.mrb[0].mxu0
  %v615 = vpop.f32.mrb[0].mxu0
  %v616 = vadd.f32 %v192, %v615
  %v617 = vpop.f32.mrb[0].mxu0
  %618 = vmatprep.mubr.bf16.mxu0 0
  %619 = vmatmul.mubr.bf16.gmra.mrb[0].mxu0 %v341
  %v620 = vpop.f32.mrb[0].mxu0
  %v621 = vadd.f32 %v192, %v620
  %v622 = vpop.f32.mrb[0].mxu0
  %v623 = vpop.f32.mrb[0].mxu0
  %v624 = vadd.f32 %v192, %v623
  %v625 = vpop.f32.mrb[0].mxu0
  %626 = vmatprep.mubr.bf16.mxu0 0
  %627 = vmatmul.mubr.bf16.gmra.mrb[0].mxu0 %v342
  %v628 = vpop.f32.mrb[0].mxu0
  %v629 = vadd.f32 %v192, %v628
  %v630 = vpop.f32.mrb[0].mxu0
  %v631 = vpop.f32.mrb[0].mxu0
  %v632 = vadd.f32 %v192, %v631
  %v633 = vpop.f32.mrb[0].mxu0
  %634 = vmatprep.mubr.bf16.mxu0 0
  %635 = vmatmul.mubr.bf16.gmra.mrb[0].mxu0 %v343
  %v636 = vpop.f32.mrb[0].mxu0
  %v637 = vadd.f32 %v192, %v636
  %v638 = vpop.f32.mrb[0].mxu0
  %v639 = vpop.f32.mrb[0].mxu0
  %v640 = vadd.f32 %v192, %v639
  %v641 = vpop.f32.mrb[0].mxu0
  %642 = vmatprep.mubr.bf16.mxu0 0
  %643 = vmatmul.mubr.bf16.gmra.mrb[0].mxu0 %v344
  %v644 = vpop.f32.mrb[0].mxu0
  %v645 = vadd.f32 %v192, %v644
  %v646 = vpop.f32.mrb[0].mxu0
  %v647 = vpop.f32.mrb[0].mxu0
  %v648 = vadd.f32 %v192, %v647
  %v649 = vpop.f32.mrb[0].mxu0
  %650 = vmatprep.mubr.bf16.mxu0 0
  %651 = vmatmul.mubr.bf16.gmra.mrb[0].mxu0 %v345
  %v652 = vpop.f32.mrb[0].mxu0
  %v653 = vadd.f32 %v192, %v652
  %v654 = vpop.f32.mrb[0].mxu0
  %v655 = vpop.f32.mrb[0].mxu0
  %v656 = vadd.f32 %v192, %v655
  %v657 = vpop.f32.mrb[0].mxu0
  %658 = vmatprep.mubr.bf16.mxu0 0
  %659 = vmatmul.mubr.bf16.gmra.mrb[0].mxu0 %v346
  %v660 = vpop.f32.mrb[0].mxu0
  %v661 = vadd.f32 %v192, %v660
  %v662 = vpop.f32.mrb[0].mxu0
  %v663 = vpop.f32.mrb[0].mxu0
  %v664 = vadd.f32 %v192, %v663
  %v665 = vpop.f32.mrb[0].mxu0
  %666 = vmatprep.mubr.bf16.mxu0 0
  %667 = vmatmul.mubr.bf16.gmra.mrb[0].mxu0 %v347
  %v668 = vpop.f32.mrb[0].mxu0
  %v669 = vadd.f32 %v192, %v668
  %v670 = vpop.f32.mrb[0].mxu0
  %v671 = vpop.f32.mrb[0].mxu0
  %v672 = vadd.f32 %v192, %v671
  %v673 = vpop.f32.mrb[0].mxu0
  %674 = vmatprep.mubr.bf16.mxu0 0
  %675 = vmatmul.mubr.bf16.gmra.mrb[0].mxu0 %v348
  %v676 = vpop.f32.mrb[0].mxu0
  %v677 = vadd.f32 %v192, %v676
  %v678 = vpop.f32.mrb[0].mxu0
  %v679 = vpop.f32.mrb[0].mxu0
  %v680 = vadd.f32 %v192, %v679
  %v681 = vpop.f32.mrb[0].mxu0
  %682 = vmatprep.mubr.bf16.mxu0 0
  %683 = vmatmul.mubr.bf16.gmra.mrb[0].mxu0 %v349
  %v684 = vpop.f32.mrb[0].mxu0
  %v685 = vadd.f32 %v192, %v684
  %v686 = vpop.f32.mrb[0].mxu0
  %v687 = vpop.f32.mrb[0].mxu0
  %v688 = vadd.f32 %v192, %v687
  %v689 = vpop.f32.mrb[0].mxu0
  %690 = vmatprep.mubr.bf16.mxu0 0
  %691 = vmatmul.mubr.bf16.gmra.mrb[0].mxu0 %v350
  %v692 = vpop.f32.mrb[0].mxu0
  %v693 = vadd.f32 %v192, %v692
  %v694 = vpop.f32.mrb[0].mxu0
  %v695 = vpop.f32.mrb[0].mxu0
  %v696 = vadd.f32 %v192, %v695
  %v697 = vpop.f32.mrb[0].mxu0
  %698 = vmatprep.mubr.bf16.mxu0 0
  %699 = vmatmul.mubr.bf16.gmra.mrb[0].mxu0 %v351
  %v700 = vpop.f32.mrb[0].mxu0
  %v701 = vadd.f32 %v192, %v700
  %v702 = vpop.f32.mrb[0].mxu0
  %v703 = vpop.f32.mrb[0].mxu0
  %v704 = vadd.f32 %v192, %v703
  %v705 = vpop.f32.mrb[0].mxu0
  %706 = vmatprep.mubr.bf16.mxu0 0
  %707 = vmatmul.mubr.bf16.gmra.mrb[0].mxu0 %v352
  %v708 = vpop.f32.mrb[0].mxu0
  %v709 = vadd.f32 %v192, %v708
  %v710 = vpop.f32.mrb[0].mxu0
  %v711 = vpop.f32.mrb[0].mxu0
  %v712 = vadd.f32 %v192, %v711
  %v713 = vpop.f32.mrb[0].mxu0
  %714 = vmatprep.mubr.bf16.mxu0 0
  %715 = vmatmul.mubr.bf16.gmra.mrb[0].mxu0 %v353
  %v716 = vpop.f32.mrb[0].mxu0
  %v717 = vadd.f32 %v192, %v716
  %v718 = vpop.f32.mrb[0].mxu0
  %v719 = vpop.f32.mrb[0].mxu0
  %v720 = vadd.f32 %v192, %v719
  %v721 = vpop.f32.mrb[0].mxu0
  %722 = vdwg.mxu0
  %v723 = vxor.u32 %v469, 2147483648
  %v724 = vxor.u32 %v472, 2147483648
  %v725 = vxor.u32 %v477, 2147483648
  %v726 = vxor.u32 %v480, 2147483648
  %v727 = vxor.u32 %v485, 2147483648
  %v728 = vxor.u32 %v488, 2147483648
  %v729 = vxor.u32 %v493, 2147483648
  %v730 = vxor.u32 %v496, 2147483648
  %v731 = vxor.u32 %v501, 2147483648
  %v732 = vxor.u32 %v504, 2147483648
  %v733 = vxor.u32 %v509, 2147483648
  %v734 = vxor.u32 %v512, 2147483648
  %v735 = vxor.u32 %v517, 2147483648
  %v736 = vxor.u32 %v520, 2147483648
  %v737 = vxor.u32 %v525, 2147483648
  %v738 = vxor.u32 %v528, 2147483648
  %v739 = vxor.u32 %v533, 2147483648
  %v740 = vxor.u32 %v536, 2147483648
  %v741 = vxor.u32 %v541, 2147483648
  %v742 = vxor.u32 %v544, 2147483648
  %v743 = vxor.u32 %v549, 2147483648
  %v744 = vxor.u32 %v552, 2147483648
  %v745 = vxor.u32 %v557, 2147483648
  %v746 = vxor.u32 %v560, 2147483648
  %v747 = vxor.u32 %v565, 2147483648
  %v748 = vxor.u32 %v568, 2147483648
  %v749 = vxor.u32 %v573, 2147483648
  %v750 = vxor.u32 %v576, 2147483648
  %v751 = vxor.u32 %v581, 2147483648
  %v752 = vxor.u32 %v584, 2147483648
  %v753 = vxor.u32 %v589, 2147483648
  %v754 = vxor.u32 %v592, 2147483648
  %v755 = vxor.u32 %v597, 2147483648
  %v756 = vxor.u32 %v600, 2147483648
  %v757 = vxor.u32 %v605, 2147483648
  %v758 = vxor.u32 %v608, 2147483648
  %v759 = vxor.u32 %v613, 2147483648
  %v760 = vxor.u32 %v616, 2147483648
  %v761 = vxor.u32 %v621, 2147483648
  %v762 = vxor.u32 %v624, 2147483648
  %v763 = vxor.u32 %v629, 2147483648
  %v764 = vxor.u32 %v632, 2147483648
  %v765 = vxor.u32 %v637, 2147483648
  %v766 = vxor.u32 %v640, 2147483648
  %v767 = vxor.u32 %v645, 2147483648
  %v768 = vxor.u32 %v648, 2147483648
  %v769 = vxor.u32 %v653, 2147483648
  %v770 = vxor.u32 %v656, 2147483648
  %v771 = vxor.u32 %v661, 2147483648
  %v772 = vxor.u32 %v664, 2147483648
  %v773 = vxor.u32 %v669, 2147483648
  %v774 = vxor.u32 %v672, 2147483648
  %v775 = vxor.u32 %v677, 2147483648
  %v776 = vxor.u32 %v680, 2147483648
  %v777 = vxor.u32 %v685, 2147483648
  %v778 = vxor.u32 %v688, 2147483648
  %v779 = vxor.u32 %v693, 2147483648
  %v780 = vxor.u32 %v696, 2147483648
  %v781 = vxor.u32 %v701, 2147483648
  %v782 = vxor.u32 %v704, 2147483648
  %v783 = vxor.u32 %v709, 2147483648
  %v784 = vxor.u32 %v712, 2147483648
  %v785 = vxor.u32 %v717, 2147483648
  %v786 = vxor.u32 %v720, 2147483648
  %v787 = vmul.f32 %v723, 1.442695
  %v788 = vpow.pop %v787
  %v789 = vmul.f32 %v724, 1.442695
  %v790 = vpow.pop %v789
  %v791 = vmul.f32 %v725, 1.442695
  %v792 = vpow.pop %v791
  %v793 = vmul.f32 %v726, 1.442695
  %v794 = vpow.pop %v793
  %v795 = vmul.f32 %v727, 1.442695
  %v796 = vpow.pop %v795
  %v797 = vmul.f32 %v728, 1.442695
  %v798 = vpow.pop %v797
  %v799 = vmul.f32 %v729, 1.442695
  %v800 = vpow.pop %v799
  %v801 = vmul.f32 %v730, 1.442695
  %v802 = vpow.pop %v801
  %v803 = vmul.f32 %v731, 1.442695
  %v804 = vpow.pop %v803
  %v805 = vmul.f32 %v732, 1.442695
  %v806 = vpow.pop %v805
  %v807 = vmul.f32 %v733, 1.442695
  %v808 = vpow.pop %v807
  %v809 = vmul.f32 %v734, 1.442695
  %v810 = vpow.pop %v809
  %v811 = vmul.f32 %v735, 1.442695
  %v812 = vpow.pop %v811
  %v813 = vmul.f32 %v736, 1.442695
  %v814 = vpow.pop %v813
  %v815 = vmul.f32 %v737, 1.442695
  %v816 = vpow.pop %v815
  %v817 = vmul.f32 %v738, 1.442695
  %v818 = vpow.pop %v817
  %v819 = vmul.f32 %v739, 1.442695
  %v820 = vpow.pop %v819
  %v821 = vmul.f32 %v740, 1.442695
  %v822 = vpow.pop %v821
  %v823 = vmul.f32 %v741, 1.442695
  %v824 = vpow.pop %v823
  %v825 = vmul.f32 %v742, 1.442695
  %v826 = vpow.pop %v825
  %v827 = vmul.f32 %v743, 1.442695
  %v828 = vpow.pop %v827
  %v829 = vmul.f32 %v744, 1.442695
  %v830 = vpow.pop %v829
  %v831 = vmul.f32 %v745, 1.442695
  %v832 = vpow.pop %v831
  %v833 = vmul.f32 %v746, 1.442695
  %v834 = vpow.pop %v833
  %v835 = vmul.f32 %v747, 1.442695
  %v836 = vpow.pop %v835
  %v837 = vmul.f32 %v748, 1.442695
  %v838 = vpow.pop %v837
  %v839 = vmul.f32 %v749, 1.442695
  %v840 = vpow.pop %v839
  %v841 = vmul.f32 %v750, 1.442695
  %v842 = vpow.pop %v841
  %v843 = vmul.f32 %v751, 1.442695
  %v844 = vpow.pop %v843
  %v845 = vmul.f32 %v752, 1.442695
  %v846 = vpow.pop %v845
  %v847 = vmul.f32 %v753, 1.442695
  %v848 = vpow.pop %v847
  %v849 = vmul.f32 %v754, 1.442695
  %v850 = vpow.pop %v849
  %v851 = vmul.f32 %v755, 1.442695
  %v852 = vpow.pop %v851
  %v853 = vmul.f32 %v756, 1.442695
  %v854 = vpow.pop %v853
  %v855 = vmul.f32 %v757, 1.442695
  %v856 = vpow.pop %v855
  %v857 = vmul.f32 %v758, 1.442695
  %v858 = vpow.pop %v857
  %v859 = vmul.f32 %v759, 1.442695
  %v860 = vpow.pop %v859
  %v861 = vmul.f32 %v760, 1.442695
  %v862 = vpow.pop %v861
  %v863 = vmul.f32 %v761, 1.442695
  %v864 = vpow.pop %v863
  %v865 = vmul.f32 %v762, 1.442695
  %v866 = vpow.pop %v865
  %v867 = vmul.f32 %v763, 1.442695
  %v868 = vpow.pop %v867
  %v869 = vmul.f32 %v764, 1.442695
  %v870 = vpow.pop %v869
  %v871 = vmul.f32 %v765, 1.442695
  %v872 = vpow.pop %v871
  %v873 = vmul.f32 %v766, 1.442695
  %v874 = vpow.pop %v873
  %v875 = vmul.f32 %v767, 1.442695
  %v876 = vpow.pop %v875
  %v877 = vmul.f32 %v768, 1.442695
  %v878 = vpow.pop %v877
  %v879 = vmul.f32 %v769, 1.442695
  %v880 = vpow.pop %v879
  %v881 = vmul.f32 %v770, 1.442695
  %v882 = vpow.pop %v881
  %v883 = vmul.f32 %v771, 1.442695
  %v884 = vpow.pop %v883
  %v885 = vmul.f32 %v772, 1.442695
  %v886 = vpow.pop %v885
  %v887 = vmul.f32 %v773, 1.442695
  %v888 = vpow.pop %v887
  %v889 = vmul.f32 %v774, 1.442695
  %v890 = vpow.pop %v889
  %v891 = vmul.f32 %v775, 1.442695
  %v892 = vpow.pop %v891
  %v893 = vmul.f32 %v776, 1.442695
  %v894 = vpow.pop %v893
  %v895 = vmul.f32 %v777, 1.442695
  %v896 = vpow.pop %v895
  %v897 = vmul.f32 %v778, 1.442695
  %v898 = vpow.pop %v897
  %v899 = vmul.f32 %v779, 1.442695
  %v900 = vpow.pop %v899
  %v901 = vmul.f32 %v780, 1.442695
  %v902 = vpow.pop %v901
  %v903 = vmul.f32 %v781, 1.442695
  %v904 = vpow.pop %v903
  %v905 = vmul.f32 %v782, 1.442695
  %v906 = vpow.pop %v905
  %v907 = vmul.f32 %v783, 1.442695
  %v908 = vpow.pop %v907
  %v909 = vmul.f32 %v784, 1.442695
  %v910 = vpow.pop %v909
  %v911 = vmul.f32 %v785, 1.442695
  %v912 = vpow.pop %v911
  %v913 = vmul.f32 %v786, 1.442695
  %v914 = vpow.pop %v913
  %v915 = vadd.f32 %v788, 1.0
  %v916 = vadd.f32 %v790, 1.0
  %v917 = vadd.f32 %v792, 1.0
  %v918 = vadd.f32 %v794, 1.0
  %v919 = vadd.f32 %v796, 1.0
  %v920 = vadd.f32 %v798, 1.0
  %v921 = vadd.f32 %v800, 1.0
  %v922 = vadd.f32 %v802, 1.0
  %v923 = vadd.f32 %v804, 1.0
  %v924 = vadd.f32 %v806, 1.0
  %v925 = vadd.f32 %v808, 1.0
  %v926 = vadd.f32 %v810, 1.0
  %v927 = vadd.f32 %v812, 1.0
  %v928 = vadd.f32 %v814, 1.0
  %v929 = vadd.f32 %v816, 1.0
  %v930 = vadd.f32 %v818, 1.0
  %v931 = vadd.f32 %v820, 1.0
  %v932 = vadd.f32 %v822, 1.0
  %v933 = vadd.f32 %v824, 1.0
  %v934 = vadd.f32 %v826, 1.0
  %v935 = vadd.f32 %v828, 1.0
  %v936 = vadd.f32 %v830, 1.0
  %v937 = vadd.f32 %v832, 1.0
  %v938 = vadd.f32 %v834, 1.0
  %v939 = vadd.f32 %v836, 1.0
  %v940 = vadd.f32 %v838, 1.0
  %v941 = vadd.f32 %v840, 1.0
  %v942 = vadd.f32 %v842, 1.0
  %v943 = vadd.f32 %v844, 1.0
  %v944 = vadd.f32 %v846, 1.0
  %v945 = vadd.f32 %v848, 1.0
  %v946 = vadd.f32 %v850, 1.0
  %v947 = vadd.f32 %v852, 1.0
  %v948 = vadd.f32 %v854, 1.0
  %v949 = vadd.f32 %v856, 1.0
  %v950 = vadd.f32 %v858, 1.0
  %v951 = vadd.f32 %v860, 1.0
  %v952 = vadd.f32 %v862, 1.0
  %v953 = vadd.f32 %v864, 1.0
  %v954 = vadd.f32 %v866, 1.0
  %v955 = vadd.f32 %v868, 1.0
  %v956 = vadd.f32 %v870, 1.0
  %v957 = vadd.f32 %v872, 1.0
  %v958 = vadd.f32 %v874, 1.0
  %v959 = vadd.f32 %v876, 1.0
  %v960 = vadd.f32 %v878, 1.0
  %v961 = vadd.f32 %v880, 1.0
  %v962 = vadd.f32 %v882, 1.0
  %v963 = vadd.f32 %v884, 1.0
  %v964 = vadd.f32 %v886, 1.0
  %v965 = vadd.f32 %v888, 1.0
  %v966 = vadd.f32 %v890, 1.0
  %v967 = vadd.f32 %v892, 1.0
  %v968 = vadd.f32 %v894, 1.0
  %v969 = vadd.f32 %v896, 1.0
  %v970 = vadd.f32 %v898, 1.0
  %v971 = vadd.f32 %v900, 1.0
  %v972 = vadd.f32 %v902, 1.0
  %v973 = vadd.f32 %v904, 1.0
  %v974 = vadd.f32 %v906, 1.0
  %v975 = vadd.f32 %v908, 1.0
  %v976 = vadd.f32 %v910, 1.0
  %v977 = vadd.f32 %v912, 1.0
  %v978 = vadd.f32 %v914, 1.0
  %v979 = vrcp.pop %v915
  %v980 = vmul.f32 1.0, %v979
  %v981 = vrcp.pop %v916
  %v982 = vmul.f32 1.0, %v981
  %v983 = vrcp.pop %v917
  %v984 = vmul.f32 1.0, %v983
  %v985 = vrcp.pop %v918
  %v986 = vmul.f32 1.0, %v985
  %v987 = vrcp.pop %v919
  %v988 = vmul.f32 1.0, %v987
  %v989 = vrcp.pop %v920
  %v990 = vmul.f32 1.0, %v989
  %v991 = vrcp.pop %v921
  %v992 = vmul.f32 1.0, %v991
  %v993 = vrcp.pop %v922
  %v994 = vmul.f32 1.0, %v993
  %v995 = vrcp.pop %v923
  %v996 = vmul.f32 1.0, %v995
  %v997 = vrcp.pop %v924
  %v998 = vmul.f32 1.0, %v997
  %v999 = vrcp.pop %v925
  %v1000 = vmul.f32 1.0, %v999
  %v1001 = vrcp.pop %v926
  %v1002 = vmul.f32 1.0, %v1001
  %v1003 = vrcp.pop %v927
  %v1004 = vmul.f32 1.0, %v1003
  %v1005 = vrcp.pop %v928
  %v1006 = vmul.f32 1.0, %v1005
  %v1007 = vrcp.pop %v929
  %v1008 = vmul.f32 1.0, %v1007
  %v1009 = vrcp.pop %v930
  %v1010 = vmul.f32 1.0, %v1009
  %v1011 = vrcp.pop %v931
  %v1012 = vmul.f32 1.0, %v1011
  %v1013 = vrcp.pop %v932
  %v1014 = vmul.f32 1.0, %v1013
  %v1015 = vrcp.pop %v933
  %v1016 = vmul.f32 1.0, %v1015
  %v1017 = vrcp.pop %v934
  %v1018 = vmul.f32 1.0, %v1017
  %v1019 = vrcp.pop %v935
  %v1020 = vmul.f32 1.0, %v1019
  %v1021 = vrcp.pop %v936
  %v1022 = vmul.f32 1.0, %v1021
  %v1023 = vrcp.pop %v937
  %v1024 = vmul.f32 1.0, %v1023
  %v1025 = vrcp.pop %v938
  %v1026 = vmul.f32 1.0, %v1025
  %v1027 = vrcp.pop %v939
  %v1028 = vmul.f32 1.0, %v1027
  %v1029 = vrcp.pop %v940
  %v1030 = vmul.f32 1.0, %v1029
  %v1031 = vrcp.pop %v941
  %v1032 = vmul.f32 1.0, %v1031
  %v1033 = vrcp.pop %v942
  %v1034 = vmul.f32 1.0, %v1033
  %v1035 = vrcp.pop %v943
  %v1036 = vmul.f32 1.0, %v1035
  %v1037 = vrcp.pop %v944
  %v1038 = vmul.f32 1.0, %v1037
  %v1039 = vrcp.pop %v945
  %v1040 = vmul.f32 1.0, %v1039
  %v1041 = vrcp.pop %v946
  %v1042 = vmul.f32 1.0, %v1041
  %v1043 = vrcp.pop %v947
  %v1044 = vmul.f32 1.0, %v1043
  %v1045 = vrcp.pop %v948
  %v1046 = vmul.f32 1.0, %v1045
  %v1047 = vrcp.pop %v949
  %v1048 = vmul.f32 1.0, %v1047
  %v1049 = vrcp.pop %v950
  %v1050 = vmul.f32 1.0, %v1049
  %v1051 = vrcp.pop %v951
  %v1052 = vmul.f32 1.0, %v1051
  %v1053 = vrcp.pop %v952
  %v1054 = vmul.f32 1.0, %v1053
  %v1055 = vrcp.pop %v953
  %v1056 = vmul.f32 1.0, %v1055
  %v1057 = vrcp.pop %v954
  %v1058 = vmul.f32 1.0, %v1057
  %v1059 = vrcp.pop %v955
  %v1060 = vmul.f32 1.0, %v1059
  %v1061 = vrcp.pop %v956
  %v1062 = vmul.f32 1.0, %v1061
  %v1063 = vrcp.pop %v957
  %v1064 = vmul.f32 1.0, %v1063
  %v1065 = vrcp.pop %v958
  %v1066 = vmul.f32 1.0, %v1065
  %v1067 = vrcp.pop %v959
  %v1068 = vmul.f32 1.0, %v1067
  %v1069 = vrcp.pop %v960
  %v1070 = vmul.f32 1.0, %v1069
  %v1071 = vrcp.pop %v961
  %v1072 = vmul.f32 1.0, %v1071
  %v1073 = vrcp.pop %v962
  %v1074 = vmul.f32 1.0, %v1073
  %v1075 = vrcp.pop %v963
  %v1076 = vmul.f32 1.0, %v1075
  %v1077 = vrcp.pop %v964
  %v1078 = vmul.f32 1.0, %v1077
  %v1079 = vrcp.pop %v965
  %v1080 = vmul.f32 1.0, %v1079
  %v1081 = vrcp.pop %v966
  %v1082 = vmul.f32 1.0, %v1081
  %v1083 = vrcp.pop %v967
  %v1084 = vmul.f32 1.0, %v1083
  %v1085 = vrcp.pop %v968
  %v1086 = vmul.f32 1.0, %v1085
  %v1087 = vrcp.pop %v969
  %v1088 = vmul.f32 1.0, %v1087
  %v1089 = vrcp.pop %v970
  %v1090 = vmul.f32 1.0, %v1089
  %v1091 = vrcp.pop %v971
  %v1092 = vmul.f32 1.0, %v1091
  %v1093 = vrcp.pop %v972
  %v1094 = vmul.f32 1.0, %v1093
  %v1095 = vrcp.pop %v973
  %v1096 = vmul.f32 1.0, %v1095
  %v1097 = vrcp.pop %v974
  %v1098 = vmul.f32 1.0, %v1097
  %v1099 = vrcp.pop %v975
  %v1100 = vmul.f32 1.0, %v1099
  %v1101 = vrcp.pop %v976
  %v1102 = vmul.f32 1.0, %v1101
  %v1103 = vrcp.pop %v977
  %v1104 = vmul.f32 1.0, %v1103
  %v1105 = vrcp.pop %v978
  %v1106 = vmul.f32 1.0, %v1105
  %v1107 = vpack.c.bf16 %v982, %v980
  %v1108 = vpack.c.bf16 %v986, %v984
  %v1109 = vpack.c.bf16 %v990, %v988
  %v1110 = vpack.c.bf16 %v994, %v992
  %v1111 = vpack.c.bf16 %v998, %v996
  %v1112 = vpack.c.bf16 %v1002, %v1000
  %v1113 = vpack.c.bf16 %v1006, %v1004
  %v1114 = vpack.c.bf16 %v1010, %v1008
  %v1115 = vpack.c.bf16 %v1014, %v1012
  %v1116 = vpack.c.bf16 %v1018, %v1016
  %v1117 = vpack.c.bf16 %v1022, %v1020
  %v1118 = vpack.c.bf16 %v1026, %v1024
  %v1119 = vpack.c.bf16 %v1030, %v1028
  %v1120 = vpack.c.bf16 %v1034, %v1032
  %v1121 = vpack.c.bf16 %v1038, %v1036
  %v1122 = vpack.c.bf16 %v1042, %v1040
  %v1123 = vpack.c.bf16 %v1046, %v1044
  %v1124 = vpack.c.bf16 %v1050, %v1048
  %v1125 = vpack.c.bf16 %v1054, %v1052
  %v1126 = vpack.c.bf16 %v1058, %v1056
  %v1127 = vpack.c.bf16 %v1062, %v1060
  %v1128 = vpack.c.bf16 %v1066, %v1064
  %v1129 = vpack.c.bf16 %v1070, %v1068
  %v1130 = vpack.c.bf16 %v1074, %v1072
  %v1131 = vpack.c.bf16 %v1078, %v1076
  %v1132 = vpack.c.bf16 %v1082, %v1080
  %v1133 = vpack.c.bf16 %v1086, %v1084
  %v1134 = vpack.c.bf16 %v1090, %v1088
  %v1135 = vpack.c.bf16 %v1094, %v1092
  %v1136 = vpack.c.bf16 %v1098, %v1096
  %v1137 = vpack.c.bf16 %v1102, %v1100
  %v1138 = vpack.c.bf16 %v1106, %v1104
  %v1171 = vunpack.c.l.b16 %v1107
  %v1172 = vunpack.c.h.b16 %v1107
  %v1173 = vunpack.c.l.b16 %v1108
  %v1174 = vunpack.c.h.b16 %v1108
  %v1175 = vunpack.c.l.b16 %v1109
  %v1176 = vunpack.c.h.b16 %v1109
  %v1177 = vunpack.c.l.b16 %v1110
  %v1178 = vunpack.c.h.b16 %v1110
  %v1179 = vunpack.c.l.b16 %v1111
  %v1180 = vunpack.c.h.b16 %v1111
  %v1181 = vunpack.c.l.b16 %v1112
  %v1182 = vunpack.c.h.b16 %v1112
  %v1183 = vunpack.c.l.b16 %v1113
  %v1184 = vunpack.c.h.b16 %v1113
  %v1185 = vunpack.c.l.b16 %v1114
  %v1186 = vunpack.c.h.b16 %v1114
  %v1187 = vunpack.c.l.b16 %v1115
  %v1188 = vunpack.c.h.b16 %v1115
  %v1189 = vunpack.c.l.b16 %v1116
  %v1190 = vunpack.c.h.b16 %v1116
  %v1191 = vunpack.c.l.b16 %v1117
  %v1192 = vunpack.c.h.b16 %v1117
  %v1193 = vunpack.c.l.b16 %v1118
  %v1194 = vunpack.c.h.b16 %v1118
  %v1195 = vunpack.c.l.b16 %v1119
  %v1196 = vunpack.c.h.b16 %v1119
  %v1197 = vunpack.c.l.b16 %v1120
  %v1198 = vunpack.c.h.b16 %v1120
  %v1199 = vunpack.c.l.b16 %v1121
  %v1200 = vunpack.c.h.b16 %v1121
  %v1201 = vunpack.c.l.b16 %v1122
  %v1202 = vunpack.c.h.b16 %v1122
  %v1203 = vunpack.c.l.b16 %v1123
  %v1204 = vunpack.c.h.b16 %v1123
  %v1205 = vunpack.c.l.b16 %v1124
  %v1206 = vunpack.c.h.b16 %v1124
  %v1207 = vunpack.c.l.b16 %v1125
  %v1208 = vunpack.c.h.b16 %v1125
  %v1209 = vunpack.c.l.b16 %v1126
  %v1210 = vunpack.c.h.b16 %v1126
  %v1211 = vunpack.c.l.b16 %v1127
  %v1212 = vunpack.c.h.b16 %v1127
  %v1213 = vunpack.c.l.b16 %v1128
  %v1214 = vunpack.c.h.b16 %v1128
  %v1215 = vunpack.c.l.b16 %v1129
  %v1216 = vunpack.c.h.b16 %v1129
  %v1217 = vunpack.c.l.b16 %v1130
  %v1218 = vunpack.c.h.b16 %v1130
  %v1219 = vunpack.c.l.b16 %v1131
  %v1220 = vunpack.c.h.b16 %v1131
  %v1221 = vunpack.c.l.b16 %v1132
  %v1222 = vunpack.c.h.b16 %v1132
  %v1223 = vunpack.c.l.b16 %v1133
  %v1224 = vunpack.c.h.b16 %v1133
  %v1225 = vunpack.c.l.b16 %v1134
  %v1226 = vunpack.c.h.b16 %v1134
  %v1227 = vunpack.c.l.b16 %v1135
  %v1228 = vunpack.c.h.b16 %v1135
  %v1229 = vunpack.c.l.b16 %v1136
  %v1230 = vunpack.c.h.b16 %v1136
  %v1231 = vunpack.c.l.b16 %v1137
  %v1232 = vunpack.c.h.b16 %v1137
  %v1233 = vunpack.c.l.b16 %v1138
  %v1234 = vunpack.c.h.b16 %v1138
  %v1235 = vpack.c.b16 %v1171, %v1171
  %v1236 = vpack.c.b16 %v1172, %v1172
  %v1237 = vpack.c.b16 %v1173, %v1173
  %v1238 = vpack.c.b16 %v1174, %v1174
  %v1239 = vpack.c.b16 %v1175, %v1175
  %v1240 = vpack.c.b16 %v1176, %v1176
  %v1241 = vpack.c.b16 %v1177, %v1177
  %v1242 = vpack.c.b16 %v1178, %v1178
  %v1243 = vpack.c.b16 %v1179, %v1179
  %v1244 = vpack.c.b16 %v1180, %v1180
  %v1245 = vpack.c.b16 %v1181, %v1181
  %v1246 = vpack.c.b16 %v1182, %v1182
  %v1247 = vpack.c.b16 %v1183, %v1183
  %v1248 = vpack.c.b16 %v1184, %v1184
  %v1249 = vpack.c.b16 %v1185, %v1185
  %v1250 = vpack.c.b16 %v1186, %v1186
  %v1251 = vpack.c.b16 %v1187, %v1187
  %v1252 = vpack.c.b16 %v1188, %v1188
  %v1253 = vpack.c.b16 %v1189, %v1189
  %v1254 = vpack.c.b16 %v1190, %v1190
  %v1255 = vpack.c.b16 %v1191, %v1191
  %v1256 = vpack.c.b16 %v1192, %v1192
  %v1257 = vpack.c.b16 %v1193, %v1193
  %v1258 = vpack.c.b16 %v1194, %v1194
  %v1259 = vpack.c.b16 %v1195, %v1195
  %v1260 = vpack.c.b16 %v1196, %v1196
  %v1261 = vpack.c.b16 %v1197, %v1197
  %v1262 = vpack.c.b16 %v1198, %v1198
  %v1263 = vpack.c.b16 %v1199, %v1199
  %v1264 = vpack.c.b16 %v1200, %v1200
  %v1265 = vpack.c.b16 %v1201, %v1201
  %v1266 = vpack.c.b16 %v1202, %v1202
  %v1267 = vpack.c.b16 %v1203, %v1203
  %v1268 = vpack.c.b16 %v1204, %v1204
  %v1269 = vpack.c.b16 %v1205, %v1205
  %v1270 = vpack.c.b16 %v1206, %v1206
  %v1271 = vpack.c.b16 %v1207, %v1207
  %v1272 = vpack.c.b16 %v1208, %v1208
  %v1273 = vpack.c.b16 %v1209, %v1209
  %v1274 = vpack.c.b16 %v1210, %v1210
  %v1275 = vpack.c.b16 %v1211, %v1211
  %v1276 = vpack.c.b16 %v1212, %v1212
  %v1277 = vpack.c.b16 %v1213, %v1213
  %v1278 = vpack.c.b16 %v1214, %v1214
  %v1279 = vpack.c.b16 %v1215, %v1215
  %v1280 = vpack.c.b16 %v1216, %v1216
  %v1281 = vpack.c.b16 %v1217, %v1217
  %v1282 = vpack.c.b16 %v1218, %v1218
  %v1283 = vpack.c.b16 %v1219, %v1219
  %v1284 = vpack.c.b16 %v1220, %v1220
  %v1285 = vpack.c.b16 %v1221, %v1221
  %v1286 = vpack.c.b16 %v1222, %v1222
  %v1287 = vpack.c.b16 %v1223, %v1223
  %v1288 = vpack.c.b16 %v1224, %v1224
  %v1289 = vpack.c.b16 %v1225, %v1225
  %v1290 = vpack.c.b16 %v1226, %v1226
  %v1291 = vpack.c.b16 %v1227, %v1227
  %v1292 = vpack.c.b16 %v1228, %v1228
  %v1293 = vpack.c.b16 %v1229, %v1229
  %v1294 = vpack.c.b16 %v1230, %v1230
  %v1295 = vpack.c.b16 %v1231, %v1231
  %v1296 = vpack.c.b16 %v1232, %v1232
  %v1297 = vpack.c.b16 %v1233, %v1233
  %v1298 = vpack.c.b16 %v1234, %v1234
  %v1363 = vmul.bf16 %v43, %v1235
  %v1364 = vmul.bf16 %v44, %v1236
  %v1365 = vmul.bf16 %v45, %v1237
  %v1366 = vmul.bf16 %v46, %v1238
  %v1367 = vmul.bf16 %v47, %v1239
  %v1368 = vmul.bf16 %v48, %v1240
  %v1369 = vmul.bf16 %v49, %v1241
  %v1370 = vmul.bf16 %v50, %v1242
  %v1371 = vmul.bf16 %v51, %v1243
  %v1372 = vmul.bf16 %v52, %v1244
  %v1373 = vmul.bf16 %v53, %v1245
  %v1374 = vmul.bf16 %v54, %v1246
  %v1375 = vmul.bf16 %v55, %v1247
  %v1376 = vmul.bf16 %v56, %v1248
  %v1377 = vmul.bf16 %v57, %v1249
  %v1378 = vmul.bf16 %v58, %v1250
  %v1379 = vmul.bf16 %v59, %v1251
  %v1380 = vmul.bf16 %v60, %v1252
  %v1381 = vmul.bf16 %v61, %v1253
  %v1382 = vmul.bf16 %v62, %v1254
  %v1383 = vmul.bf16 %v63, %v1255
  %v1384 = vmul.bf16 %v64, %v1256
  %v1385 = vmul.bf16 %v65, %v1257
  %v1386 = vmul.bf16 %v66, %v1258
  %v1387 = vmul.bf16 %v67, %v1259
  %v1388 = vmul.bf16 %v68, %v1260
  %v1389 = vmul.bf16 %v69, %v1261
  %v1390 = vmul.bf16 %v70, %v1262
  %v1391 = vmul.bf16 %v71, %v1263
  %v1392 = vmul.bf16 %v72, %v1264
  %v1393 = vmul.bf16 %v73, %v1265
  %v1394 = vmul.bf16 %v74, %v1266
  %v1395 = vmul.bf16 %v75, %v1267
  %v1396 = vmul.bf16 %v76, %v1268
  %v1397 = vmul.bf16 %v77, %v1269
  %v1398 = vmul.bf16 %v78, %v1270
  %v1399 = vmul.bf16 %v79, %v1271
  %v1400 = vmul.bf16 %v80, %v1272
  %v1401 = vmul.bf16 %v81, %v1273
  %v1402 = vmul.bf16 %v82, %v1274
  %v1403 = vmul.bf16 %v83, %v1275
  %v1404 = vmul.bf16 %v84, %v1276
  %v1405 = vmul.bf16 %v85, %v1277
  %v1406 = vmul.bf16 %v86, %v1278
  %v1407 = vmul.bf16 %v87, %v1279
  %v1408 = vmul.bf16 %v88, %v1280
  %v1409 = vmul.bf16 %v89, %v1281
  %v1410 = vmul.bf16 %v90, %v1282
  %v1411 = vmul.bf16 %v91, %v1283
  %v1412 = vmul.bf16 %v92, %v1284
  %v1413 = vmul.bf16 %v93, %v1285
  %v1414 = vmul.bf16 %v94, %v1286
  %v1415 = vmul.bf16 %v95, %v1287
  %v1416 = vmul.bf16 %v96, %v1288
  %v1417 = vmul.bf16 %v97, %v1289
  %v1418 = vmul.bf16 %v98, %v1290
  %v1419 = vmul.bf16 %v99, %v1291
  %v1420 = vmul.bf16 %v100, %v1292
  %v1421 = vmul.bf16 %v101, %v1293
  %v1422 = vmul.bf16 %v102, %v1294
  %v1423 = vmul.bf16 %v103, %v1295
  %v1424 = vmul.bf16 %v104, %v1296
  %v1425 = vmul.bf16 %v105, %v1297
  %v1426 = vmul.bf16 %v106, %v1298
  %v1427 = vunpack.c.l.bf16 %v1363
  %v1428 = vunpack.c.l.bf16 %v1364
  %v1429 = vunpack.c.l.bf16 %v1365
  %v1430 = vunpack.c.l.bf16 %v1366
  %v1431 = vunpack.c.l.bf16 %v1367
  %v1432 = vunpack.c.l.bf16 %v1368
  %v1433 = vunpack.c.l.bf16 %v1369
  %v1434 = vunpack.c.l.bf16 %v1370
  %v1435 = vunpack.c.l.bf16 %v1371
  %v1436 = vunpack.c.l.bf16 %v1372
  %v1437 = vunpack.c.l.bf16 %v1373
  %v1438 = vunpack.c.l.bf16 %v1374
  %v1439 = vunpack.c.l.bf16 %v1375
  %v1440 = vunpack.c.l.bf16 %v1376
  %v1441 = vunpack.c.l.bf16 %v1377
  %v1442 = vunpack.c.l.bf16 %v1378
  %v1443 = vunpack.c.l.bf16 %v1379
  %v1444 = vunpack.c.l.bf16 %v1380
  %v1445 = vunpack.c.l.bf16 %v1381
  %v1446 = vunpack.c.l.bf16 %v1382
  %v1447 = vunpack.c.l.bf16 %v1383
  %v1448 = vunpack.c.l.bf16 %v1384
  %v1449 = vunpack.c.l.bf16 %v1385
  %v1450 = vunpack.c.l.bf16 %v1386
  %v1451 = vunpack.c.l.bf16 %v1387
  %v1452 = vunpack.c.l.bf16 %v1388
  %v1453 = vunpack.c.l.bf16 %v1389
  %v1454 = vunpack.c.l.bf16 %v1390
  %v1455 = vunpack.c.l.bf16 %v1391
  %v1456 = vunpack.c.l.bf16 %v1392
  %v1457 = vunpack.c.l.bf16 %v1393
  %v1458 = vunpack.c.l.bf16 %v1394
  %v1459 = vunpack.c.l.bf16 %v1395
  %v1460 = vunpack.c.l.bf16 %v1396
  %v1461 = vunpack.c.l.bf16 %v1397
  %v1462 = vunpack.c.l.bf16 %v1398
  %v1463 = vunpack.c.l.bf16 %v1399
  %v1464 = vunpack.c.l.bf16 %v1400
  %v1465 = vunpack.c.l.bf16 %v1401
  %v1466 = vunpack.c.l.bf16 %v1402
  %v1467 = vunpack.c.l.bf16 %v1403
  %v1468 = vunpack.c.l.bf16 %v1404
  %v1469 = vunpack.c.l.bf16 %v1405
  %v1470 = vunpack.c.l.bf16 %v1406
  %v1471 = vunpack.c.l.bf16 %v1407
  %v1472 = vunpack.c.l.bf16 %v1408
  %v1473 = vunpack.c.l.bf16 %v1409
  %v1474 = vunpack.c.l.bf16 %v1410
  %v1475 = vunpack.c.l.bf16 %v1411
  %v1476 = vunpack.c.l.bf16 %v1412
  %v1477 = vunpack.c.l.bf16 %v1413
  %v1478 = vunpack.c.l.bf16 %v1414
  %v1479 = vunpack.c.l.bf16 %v1415
  %v1480 = vunpack.c.l.bf16 %v1416
  %v1481 = vunpack.c.l.bf16 %v1417
  %v1482 = vunpack.c.l.bf16 %v1418
  %v1483 = vunpack.c.l.bf16 %v1419
  %v1484 = vunpack.c.l.bf16 %v1420
  %v1485 = vunpack.c.l.bf16 %v1421
  %v1486 = vunpack.c.l.bf16 %v1422
  %v1487 = vunpack.c.l.bf16 %v1423
  %v1488 = vunpack.c.l.bf16 %v1424
  %v1489 = vunpack.c.l.bf16 %v1425
  %v1490 = vunpack.c.l.bf16 %v1426
  %v1491 = vadd.f32 %v1427, %v1443
  %v1492 = vadd.f32 %v1491, %v1459
  %v1493 = vadd.f32 %v1492, %v1475
  %v1494 = vadd.f32 %v1428, %v1444
  %v1495 = vadd.f32 %v1494, %v1460
  %v1496 = vadd.f32 %v1495, %v1476
  %v1497 = vadd.f32 %v1429, %v1445
  %v1498 = vadd.f32 %v1497, %v1461
  %v1499 = vadd.f32 %v1498, %v1477
  %v1500 = vadd.f32 %v1430, %v1446
  %v1501 = vadd.f32 %v1500, %v1462
  %v1502 = vadd.f32 %v1501, %v1478
  %v1503 = vadd.f32 %v1431, %v1447
  %v1504 = vadd.f32 %v1503, %v1463
  %v1505 = vadd.f32 %v1504, %v1479
  %v1506 = vadd.f32 %v1432, %v1448
  %v1507 = vadd.f32 %v1506, %v1464
  %v1508 = vadd.f32 %v1507, %v1480
  %v1509 = vadd.f32 %v1433, %v1449
  %v1510 = vadd.f32 %v1509, %v1465
  %v1511 = vadd.f32 %v1510, %v1481
  %v1512 = vadd.f32 %v1434, %v1450
  %v1513 = vadd.f32 %v1512, %v1466
  %v1514 = vadd.f32 %v1513, %v1482
  %v1515 = vadd.f32 %v1435, %v1451
  %v1516 = vadd.f32 %v1515, %v1467
  %v1517 = vadd.f32 %v1516, %v1483
  %v1518 = vadd.f32 %v1436, %v1452
  %v1519 = vadd.f32 %v1518, %v1468
  %v1520 = vadd.f32 %v1519, %v1484
  %v1521 = vadd.f32 %v1437, %v1453
  %v1522 = vadd.f32 %v1521, %v1469
  %v1523 = vadd.f32 %v1522, %v1485
  %v1524 = vadd.f32 %v1438, %v1454
  %v1525 = vadd.f32 %v1524, %v1470
  %v1526 = vadd.f32 %v1525, %v1486
  %v1527 = vadd.f32 %v1439, %v1455
  %v1528 = vadd.f32 %v1527, %v1471
  %v1529 = vadd.f32 %v1528, %v1487
  %v1530 = vadd.f32 %v1440, %v1456
  %v1531 = vadd.f32 %v1530, %v1472
  %v1532 = vadd.f32 %v1531, %v1488
  %v1533 = vadd.f32 %v1441, %v1457
  %v1534 = vadd.f32 %v1533, %v1473
  %v1535 = vadd.f32 %v1534, %v1489
  %v1536 = vadd.f32 %v1442, %v1458
  %v1537 = vadd.f32 %v1536, %v1474
  %v1538 = vadd.f32 %v1537, %v1490
  %v1539 = vpack.c.bf16 %v1496, %v1493
  %v1540 = vpack.c.bf16 %v1502, %v1499
  %v1541 = vpack.c.bf16 %v1508, %v1505
  %v1542 = vpack.c.bf16 %v1514, %v1511
  %v1543 = vpack.c.bf16 %v1520, %v1517
  %v1544 = vpack.c.bf16 %v1526, %v1523
  %v1545 = vpack.c.bf16 %v1532, %v1529
  %v1546 = vpack.c.bf16 %v1538, %v1535
  %v1547 = vunpack.c.l.bf16 %v1539
  %v1548 = vunpack.c.h.bf16 %v1539
  %v1549 = vunpack.c.l.bf16 %v1540
  %v1550 = vunpack.c.h.bf16 %v1540
  %v1551 = vunpack.c.l.bf16 %v1541
  %v1552 = vunpack.c.h.bf16 %v1541
  %v1553 = vunpack.c.l.bf16 %v1542
  %v1554 = vunpack.c.h.bf16 %v1542
  %v1555 = vunpack.c.l.bf16 %v1543
  %v1556 = vunpack.c.h.bf16 %v1543
  %v1557 = vunpack.c.l.bf16 %v1544
  %v1558 = vunpack.c.h.bf16 %v1544
  %v1559 = vunpack.c.l.bf16 %v1545
  %v1560 = vunpack.c.h.bf16 %v1545
  %v1561 = vunpack.c.l.bf16 %v1546
  %v1562 = vunpack.c.h.bf16 %v1546
  %v1563 = vadd.f32 %v980, %v1012
  %v1564 = vadd.f32 %v1563, %v1044
  %v1565 = vadd.f32 %v1564, %v1076
  %v1566 = vadd.f32 %v982, %v1014
  %v1567 = vadd.f32 %v1566, %v1046
  %v1568 = vadd.f32 %v1567, %v1078
  %v1569 = vadd.f32 %v984, %v1016
  %v1570 = vadd.f32 %v1569, %v1048
  %v1571 = vadd.f32 %v1570, %v1080
  %v1572 = vadd.f32 %v986, %v1018
  %v1573 = vadd.f32 %v1572, %v1050
  %v1574 = vadd.f32 %v1573, %v1082
  %v1575 = vadd.f32 %v988, %v1020
  %v1576 = vadd.f32 %v1575, %v1052
  %v1577 = vadd.f32 %v1576, %v1084
  %v1578 = vadd.f32 %v990, %v1022
  %v1579 = vadd.f32 %v1578, %v1054
  %v1580 = vadd.f32 %v1579, %v1086
  %v1581 = vadd.f32 %v992, %v1024
  %v1582 = vadd.f32 %v1581, %v1056
  %v1583 = vadd.f32 %v1582, %v1088
  %v1584 = vadd.f32 %v994, %v1026
  %v1585 = vadd.f32 %v1584, %v1058
  %v1586 = vadd.f32 %v1585, %v1090
  %v1587 = vadd.f32 %v996, %v1028
  %v1588 = vadd.f32 %v1587, %v1060
  %v1589 = vadd.f32 %v1588, %v1092
  %v1590 = vadd.f32 %v998, %v1030
  %v1591 = vadd.f32 %v1590, %v1062
  %v1592 = vadd.f32 %v1591, %v1094
  %v1593 = vadd.f32 %v1000, %v1032
  %v1594 = vadd.f32 %v1593, %v1064
  %v1595 = vadd.f32 %v1594, %v1096
  %v1596 = vadd.f32 %v1002, %v1034
  %v1597 = vadd.f32 %v1596, %v1066
  %v1598 = vadd.f32 %v1597, %v1098
  %v1599 = vadd.f32 %v1004, %v1036
  %v1600 = vadd.f32 %v1599, %v1068
  %v1601 = vadd.f32 %v1600, %v1100
  %v1602 = vadd.f32 %v1006, %v1038
  %v1603 = vadd.f32 %v1602, %v1070
  %v1604 = vadd.f32 %v1603, %v1102
  %v1605 = vadd.f32 %v1008, %v1040
  %v1606 = vadd.f32 %v1605, %v1072
  %v1607 = vadd.f32 %v1606, %v1104
  %v1608 = vadd.f32 %v1010, %v1042
  %v1609 = vadd.f32 %v1608, %v1074
  %v1610 = vadd.f32 %v1609, %v1106
  %v1611 = vadd.f32 %v1565, 1e-06
  %v1612 = vadd.f32 %v1568, 1e-06
  %v1613 = vadd.f32 %v1571, 1e-06
  %v1614 = vadd.f32 %v1574, 1e-06
  %v1615 = vadd.f32 %v1577, 1e-06
  %v1616 = vadd.f32 %v1580, 1e-06
  %v1617 = vadd.f32 %v1583, 1e-06
  %v1618 = vadd.f32 %v1586, 1e-06
  %v1619 = vadd.f32 %v1589, 1e-06
  %v1620 = vadd.f32 %v1592, 1e-06
  %v1621 = vadd.f32 %v1595, 1e-06
  %v1622 = vadd.f32 %v1598, 1e-06
  %v1623 = vadd.f32 %v1601, 1e-06
  %v1624 = vadd.f32 %v1604, 1e-06
  %v1625 = vadd.f32 %v1607, 1e-06
  %v1626 = vadd.f32 %v1610, 1e-06
  %v1627 = vrcp.pop %v1611
  %v1628 = vrcp.pop %v1612
  %v1629 = vrcp.pop %v1613
  %v1630 = vrcp.pop %v1614
  %v1631 = vrcp.pop %v1615
  %v1632 = vrcp.pop %v1616
  %v1633 = vrcp.pop %v1617
  %v1634 = vrcp.pop %v1618
  %v1635 = vrcp.pop %v1619
  %v1636 = vrcp.pop %v1620
  %v1637 = vrcp.pop %v1621
  %v1638 = vrcp.pop %v1622
  %v1639 = vrcp.pop %v1623
  %v1640 = vrcp.pop %v1624
  %v1641 = vrcp.pop %v1625
  %v1642 = vrcp.pop %v1626
  %v1643 = vmul.f32 %v1547, %v1627
  %v1644 = vmul.f32 %v1548, %v1628
  %v1645 = vmul.f32 %v1549, %v1629
  %v1646 = vmul.f32 %v1550, %v1630
  %v1647 = vmul.f32 %v1551, %v1631
  %v1648 = vmul.f32 %v1552, %v1632
  %v1649 = vmul.f32 %v1553, %v1633
  %v1650 = vmul.f32 %v1554, %v1634
  %v1651 = vmul.f32 %v1555, %v1635
  %v1652 = vmul.f32 %v1556, %v1636
  %v1653 = vmul.f32 %v1557, %v1637
  %v1654 = vmul.f32 %v1558, %v1638
  %v1655 = vmul.f32 %v1559, %v1639
  %v1656 = vmul.f32 %v1560, %v1640
  %v1657 = vmul.f32 %v1561, %v1641
  %v1658 = vmul.f32 %v1562, %v1642
  %v1659 = vpack.c.bf16 %v1644, %v1643
  %v1660 = vpack.c.bf16 %v1646, %v1645
  %v1661 = vpack.c.bf16 %v1648, %v1647
  %v1662 = vpack.c.bf16 %v1650, %v1649
  %v1663 = vpack.c.bf16 %v1652, %v1651
  %v1664 = vpack.c.bf16 %v1654, %v1653
  %v1665 = vpack.c.bf16 %v1656, %v1655
  %v1666 = vpack.c.bf16 %v1658, %v1657
  %v1667 = vld [vmem:[%s4] sm:$0xff]
  %v1668 = vld [vmem:[%s4 + $0x8] sm:$0xff]
  %v1669 = vld [vmem:[%s4 + $0x10] sm:$0xff]
  %v1670 = vld [vmem:[%s4 + $0x18] sm:$0xff]
  %v1671 = vld [vmem:[%s4 + $0x20] sm:$0xff]
  %v1672 = vld [vmem:[%s4 + $0x28] sm:$0xff]
  %v1673 = vld [vmem:[%s4 + $0x30] sm:$0xff]
  %v1674 = vld [vmem:[%s4 + $0x38] sm:$0xff]
  %v1675 = vld [vmem:[%s4 + $0x40] sm:$0xff]
  %v1676 = vld [vmem:[%s4 + $0x48] sm:$0xff]
  %v1677 = vld [vmem:[%s4 + $0x50] sm:$0xff]
  %v1678 = vld [vmem:[%s4 + $0x58] sm:$0xff]
  %v1679 = vld [vmem:[%s4 + $0x60] sm:$0xff]
  %v1680 = vld [vmem:[%s4 + $0x68] sm:$0xff]
  %v1681 = vld [vmem:[%s4 + $0x70] sm:$0xff]
  %v1682 = vld [vmem:[%s4 + $0x78] sm:$0xff]
  %v1683 = vld [vmem:[%s5] sm:$0xff]
  %v1684 = vld [vmem:[%s5 + $0x8] sm:$0xff]
  %v1685 = vld [vmem:[%s5 + $0x10] sm:$0xff]
  %v1686 = vld [vmem:[%s5 + $0x18] sm:$0xff]
  %v1687 = vld [vmem:[%s5 + $0x20] sm:$0xff]
  %v1688 = vld [vmem:[%s5 + $0x28] sm:$0xff]
  %v1689 = vld [vmem:[%s5 + $0x30] sm:$0xff]
  %v1690 = vld [vmem:[%s5 + $0x38] sm:$0xff]
  %v1691 = vld [vmem:[%s5 + $0x40] sm:$0xff]
  %v1692 = vld [vmem:[%s5 + $0x48] sm:$0xff]
  %v1693 = vld [vmem:[%s5 + $0x50] sm:$0xff]
  %v1694 = vld [vmem:[%s5 + $0x58] sm:$0xff]
  %v1695 = vld [vmem:[%s5 + $0x60] sm:$0xff]
  %v1696 = vld [vmem:[%s5 + $0x68] sm:$0xff]
  %v1697 = vld [vmem:[%s5 + $0x70] sm:$0xff]
  %v1698 = vld [vmem:[%s5 + $0x78] sm:$0xff]
  %v1715 = vunpack.c.l.b16 %v27
  %v1716 = vunpack.c.l.b16 %v28
  %v1717 = vunpack.c.l.b16 %v29
  %v1718 = vunpack.c.l.b16 %v30
  %v1719 = vunpack.c.l.b16 %v31
  %v1720 = vunpack.c.l.b16 %v32
  %v1721 = vunpack.c.l.b16 %v33
  %v1722 = vunpack.c.l.b16 %v34
  %v1723 = vunpack.c.l.b16 %v35
  %v1724 = vunpack.c.l.b16 %v36
  %v1725 = vunpack.c.l.b16 %v37
  %v1726 = vunpack.c.l.b16 %v38
  %v1727 = vunpack.c.l.b16 %v39
  %v1728 = vunpack.c.l.b16 %v40
  %v1729 = vunpack.c.l.b16 %v41
  %v1730 = vunpack.c.l.b16 %v42
  %v1731 = vpack.c.b16 %v1716, %v1715
  %v1732 = vpack.c.b16 %v1718, %v1717
  %v1733 = vpack.c.b16 %v1720, %v1719
  %v1734 = vpack.c.b16 %v1722, %v1721
  %v1735 = vpack.c.b16 %v1724, %v1723
  %v1736 = vpack.c.b16 %v1726, %v1725
  %v1737 = vpack.c.b16 %v1728, %v1727
  %v1738 = vpack.c.b16 %v1730, %v1729
  %v1763 = vunpack.c.l.b16 %v1683
  %v1764 = vunpack.c.h.b16 %v1683
  %v1765 = vunpack.c.l.b16 %v1684
  %v1766 = vunpack.c.h.b16 %v1684
  %v1767 = vunpack.c.l.b16 %v1685
  %v1768 = vunpack.c.h.b16 %v1685
  %v1769 = vunpack.c.l.b16 %v1686
  %v1770 = vunpack.c.h.b16 %v1686
  %v1771 = vunpack.c.l.b16 %v1687
  %v1772 = vunpack.c.h.b16 %v1687
  %v1773 = vunpack.c.l.b16 %v1688
  %v1774 = vunpack.c.h.b16 %v1688
  %v1775 = vunpack.c.l.b16 %v1689
  %v1776 = vunpack.c.h.b16 %v1689
  %v1777 = vunpack.c.l.b16 %v1690
  %v1778 = vunpack.c.h.b16 %v1690
  %v1779 = vunpack.c.l.b16 %v1691
  %v1780 = vunpack.c.h.b16 %v1691
  %v1781 = vunpack.c.l.b16 %v1692
  %v1782 = vunpack.c.h.b16 %v1692
  %v1783 = vunpack.c.l.b16 %v1693
  %v1784 = vunpack.c.h.b16 %v1693
  %v1785 = vunpack.c.l.b16 %v1694
  %v1786 = vunpack.c.h.b16 %v1694
  %v1787 = vunpack.c.l.b16 %v1695
  %v1788 = vunpack.c.h.b16 %v1695
  %v1789 = vunpack.c.l.b16 %v1696
  %v1790 = vunpack.c.h.b16 %v1696
  %v1791 = vunpack.c.l.b16 %v1697
  %v1792 = vunpack.c.h.b16 %v1697
  %v1793 = vunpack.c.l.b16 %v1698
  %v1794 = vunpack.c.h.b16 %v1698
  %v1795 = vpack.c.b16 %v1765, %v1763
  %v1796 = vpack.c.b16 %v1766, %v1764
  %v1797 = vpack.c.b16 %v1769, %v1767
  %v1798 = vpack.c.b16 %v1770, %v1768
  %v1799 = vpack.c.b16 %v1773, %v1771
  %v1800 = vpack.c.b16 %v1774, %v1772
  %v1801 = vpack.c.b16 %v1777, %v1775
  %v1802 = vpack.c.b16 %v1778, %v1776
  %v1803 = vpack.c.b16 %v1781, %v1779
  %v1804 = vpack.c.b16 %v1782, %v1780
  %v1805 = vpack.c.b16 %v1785, %v1783
  %v1806 = vpack.c.b16 %v1786, %v1784
  %v1807 = vpack.c.b16 %v1789, %v1787
  %v1808 = vpack.c.b16 %v1790, %v1788
  %v1809 = vpack.c.b16 %v1793, %v1791
  %v1810 = vpack.c.b16 %v1794, %v1792
  %1827 = vmatprep.subr.bf16.mxu0 %v1796
  %1828 = vmatpush1.bf16.msra.mxu0 %v1795
  %1829 = vmatprep.subr.bf16.mxu0 %v1798
  %1830 = vmatpush1.bf16.msra.mxu0 %v1797
  %1831 = vmatprep.subr.bf16.mxu0 %v1800
  %1832 = vmatpush1.bf16.msra.mxu0 %v1799
  %1833 = vmatprep.subr.bf16.mxu0 %v1802
  %1834 = vmatpush1.bf16.msra.mxu0 %v1801
  %1835 = vmatprep.subr.bf16.mxu0 %v1804
  %1836 = vmatpush1.bf16.msra.mxu0 %v1803
  %1837 = vmatprep.subr.bf16.mxu0 %v1806
  %1838 = vmatpush1.bf16.msra.mxu0 %v1805
  %1839 = vmatprep.subr.bf16.mxu0 %v1808
  %1840 = vmatpush1.bf16.msra.mxu0 %v1807
  %1841 = vmatprep.subr.bf16.mxu0 %v1810
  %1842 = vmatpush1.bf16.msra.mxu0 %v1809
  %1843 = vmatprep.subr.bf16.mxu0 0
  %1844 = vmatpush1.bf16.msra.mxu0 0
  %1845 = vmatprep.subr.bf16.mxu0 0
  %1846 = vmatpush1.bf16.msra.mxu0 0
  %1847 = vmatprep.subr.bf16.mxu0 0
  %1848 = vmatpush1.bf16.msra.mxu0 0
  %1849 = vmatprep.subr.bf16.mxu0 0
  %1850 = vmatpush1.bf16.msra.mxu0 0
  %1851 = vmatprep.subr.bf16.mxu0 0
  %1852 = vmatpush1.bf16.msra.mxu0 0
  %1853 = vmatprep.subr.bf16.mxu0 0
  %1854 = vmatpush1.bf16.msra.mxu0 0
  %1855 = vmatprep.subr.bf16.mxu0 0
  %1856 = vmatpush1.bf16.msra.mxu0 0
  %1857 = vmatprep.subr.bf16.mxu0 0
  %1858 = vmatpush1.bf16.msra.mxu0 0
  %1859 = vmatprep.mubr.bf16.mxu0 0
  %1860 = vmatmul.mubr.bf16.gmra.mrb[0].mxu0 %v1731
  %v1861 = vpop.f32.mrb[0].mxu0
  %v1862 = vadd.f32 0.0, %v1861
  %v1863 = vpop.f32.mrb[0].mxu0
  %v1864 = vadd.f32 0.0, %v1863
  %v1865 = vpop.f32.mrb[0].mxu0
  %v1866 = vadd.f32 0.0, %v1865
  %v1867 = vpop.f32.mrb[0].mxu0
  %v1868 = vadd.f32 0.0, %v1867
  %1869 = vmatprep.mubr.bf16.mxu0 0
  %1870 = vmatmul.mubr.bf16.gmra.mrb[0].mxu0 %v1732
  %v1871 = vpop.f32.mrb[0].mxu0
  %v1872 = vadd.f32 0.0, %v1871
  %v1873 = vpop.f32.mrb[0].mxu0
  %v1874 = vadd.f32 0.0, %v1873
  %v1875 = vpop.f32.mrb[0].mxu0
  %v1876 = vadd.f32 0.0, %v1875
  %v1877 = vpop.f32.mrb[0].mxu0
  %v1878 = vadd.f32 0.0, %v1877
  %1879 = vmatprep.mubr.bf16.mxu0 0
  %1880 = vmatmul.mubr.bf16.gmra.mrb[0].mxu0 %v1733
  %v1881 = vpop.f32.mrb[0].mxu0
  %v1882 = vadd.f32 0.0, %v1881
  %v1883 = vpop.f32.mrb[0].mxu0
  %v1884 = vadd.f32 0.0, %v1883
  %v1885 = vpop.f32.mrb[0].mxu0
  %v1886 = vadd.f32 0.0, %v1885
  %v1887 = vpop.f32.mrb[0].mxu0
  %v1888 = vadd.f32 0.0, %v1887
  %1889 = vmatprep.mubr.bf16.mxu0 0
  %1890 = vmatmul.mubr.bf16.gmra.mrb[0].mxu0 %v1734
  %v1891 = vpop.f32.mrb[0].mxu0
  %v1892 = vadd.f32 0.0, %v1891
  %v1893 = vpop.f32.mrb[0].mxu0
  %v1894 = vadd.f32 0.0, %v1893
  %v1895 = vpop.f32.mrb[0].mxu0
  %v1896 = vadd.f32 0.0, %v1895
  %v1897 = vpop.f32.mrb[0].mxu0
  %v1898 = vadd.f32 0.0, %v1897
  %1899 = vmatprep.mubr.bf16.mxu0 0
  %1900 = vmatmul.mubr.bf16.gmra.mrb[0].mxu0 %v1735
  %v1901 = vpop.f32.mrb[0].mxu0
  %v1902 = vadd.f32 0.0, %v1901
  %v1903 = vpop.f32.mrb[0].mxu0
  %v1904 = vadd.f32 0.0, %v1903
  %v1905 = vpop.f32.mrb[0].mxu0
  %v1906 = vadd.f32 0.0, %v1905
  %v1907 = vpop.f32.mrb[0].mxu0
  %v1908 = vadd.f32 0.0, %v1907
  %1909 = vmatprep.mubr.bf16.mxu0 0
  %1910 = vmatmul.mubr.bf16.gmra.mrb[0].mxu0 %v1736
  %v1911 = vpop.f32.mrb[0].mxu0
  %v1912 = vadd.f32 0.0, %v1911
  %v1913 = vpop.f32.mrb[0].mxu0
  %v1914 = vadd.f32 0.0, %v1913
  %v1915 = vpop.f32.mrb[0].mxu0
  %v1916 = vadd.f32 0.0, %v1915
  %v1917 = vpop.f32.mrb[0].mxu0
  %v1918 = vadd.f32 0.0, %v1917
  %1919 = vmatprep.mubr.bf16.mxu0 0
  %1920 = vmatmul.mubr.bf16.gmra.mrb[0].mxu0 %v1737
  %v1921 = vpop.f32.mrb[0].mxu0
  %v1922 = vadd.f32 0.0, %v1921
  %v1923 = vpop.f32.mrb[0].mxu0
  %v1924 = vadd.f32 0.0, %v1923
  %v1925 = vpop.f32.mrb[0].mxu0
  %v1926 = vadd.f32 0.0, %v1925
  %v1927 = vpop.f32.mrb[0].mxu0
  %v1928 = vadd.f32 0.0, %v1927
  %1929 = vmatprep.mubr.bf16.mxu0 0
  %1930 = vmatmul.mubr.bf16.gmra.mrb[0].mxu0 %v1738
  %v1931 = vpop.f32.mrb[0].mxu0
  %v1932 = vadd.f32 0.0, %v1931
  %v1933 = vpop.f32.mrb[0].mxu0
  %v1934 = vadd.f32 0.0, %v1933
  %v1935 = vpop.f32.mrb[0].mxu0
  %v1936 = vadd.f32 0.0, %v1935
  %v1937 = vpop.f32.mrb[0].mxu0
  %v1938 = vadd.f32 0.0, %v1937
  %1939 = vdwg.mxu0
  %v1956 = vunpack.c.l.b16 %v1667
  %v1957 = vunpack.c.h.b16 %v1667
  %v1958 = vunpack.c.l.b16 %v1668
  %v1959 = vunpack.c.h.b16 %v1668
  %v1960 = vunpack.c.l.b16 %v1669
  %v1961 = vunpack.c.h.b16 %v1669
  %v1962 = vunpack.c.l.b16 %v1670
  %v1963 = vunpack.c.h.b16 %v1670
  %v1964 = vunpack.c.l.b16 %v1671
  %v1965 = vunpack.c.h.b16 %v1671
  %v1966 = vunpack.c.l.b16 %v1672
  %v1967 = vunpack.c.h.b16 %v1672
  %v1968 = vunpack.c.l.b16 %v1673
  %v1969 = vunpack.c.h.b16 %v1673
  %v1970 = vunpack.c.l.b16 %v1674
  %v1971 = vunpack.c.h.b16 %v1674
  %v1972 = vunpack.c.l.b16 %v1675
  %v1973 = vunpack.c.h.b16 %v1675
  %v1974 = vunpack.c.l.b16 %v1676
  %v1975 = vunpack.c.h.b16 %v1676
  %v1976 = vunpack.c.l.b16 %v1677
  %v1977 = vunpack.c.h.b16 %v1677
  %v1978 = vunpack.c.l.b16 %v1678
  %v1979 = vunpack.c.h.b16 %v1678
  %v1980 = vunpack.c.l.b16 %v1679
  %v1981 = vunpack.c.h.b16 %v1679
  %v1982 = vunpack.c.l.b16 %v1680
  %v1983 = vunpack.c.h.b16 %v1680
  %v1984 = vunpack.c.l.b16 %v1681
  %v1985 = vunpack.c.h.b16 %v1681
  %v1986 = vunpack.c.l.b16 %v1682
  %v1987 = vunpack.c.h.b16 %v1682
  %v1988 = vpack.c.b16 %v1958, %v1956
  %v1989 = vpack.c.b16 %v1959, %v1957
  %v1990 = vpack.c.b16 %v1962, %v1960
  %v1991 = vpack.c.b16 %v1963, %v1961
  %v1992 = vpack.c.b16 %v1966, %v1964
  %v1993 = vpack.c.b16 %v1967, %v1965
  %v1994 = vpack.c.b16 %v1970, %v1968
  %v1995 = vpack.c.b16 %v1971, %v1969
  %v1996 = vpack.c.b16 %v1974, %v1972
  %v1997 = vpack.c.b16 %v1975, %v1973
  %v1998 = vpack.c.b16 %v1978, %v1976
  %v1999 = vpack.c.b16 %v1979, %v1977
  %v2000 = vpack.c.b16 %v1982, %v1980
  %v2001 = vpack.c.b16 %v1983, %v1981
  %v2002 = vpack.c.b16 %v1986, %v1984
  %v2003 = vpack.c.b16 %v1987, %v1985
  %2020 = vmatprep.subr.bf16.mxu0 %v1989
  %2021 = vmatpush1.bf16.msra.mxu0 %v1988
  %2022 = vmatprep.subr.bf16.mxu0 %v1991
  %2023 = vmatpush1.bf16.msra.mxu0 %v1990
  %2024 = vmatprep.subr.bf16.mxu0 %v1993
  %2025 = vmatpush1.bf16.msra.mxu0 %v1992
  %2026 = vmatprep.subr.bf16.mxu0 %v1995
  %2027 = vmatpush1.bf16.msra.mxu0 %v1994
  %2028 = vmatprep.subr.bf16.mxu0 %v1997
  %2029 = vmatpush1.bf16.msra.mxu0 %v1996
  %2030 = vmatprep.subr.bf16.mxu0 %v1999
  %2031 = vmatpush1.bf16.msra.mxu0 %v1998
  %2032 = vmatprep.subr.bf16.mxu0 %v2001
  %2033 = vmatpush1.bf16.msra.mxu0 %v2000
  %2034 = vmatprep.subr.bf16.mxu0 %v2003
  %2035 = vmatpush1.bf16.msra.mxu0 %v2002
  %2036 = vmatprep.subr.bf16.mxu0 0
  %2037 = vmatpush1.bf16.msra.mxu0 0
  %2038 = vmatprep.subr.bf16.mxu0 0
  %2039 = vmatpush1.bf16.msra.mxu0 0
  %2040 = vmatprep.subr.bf16.mxu0 0
  %2041 = vmatpush1.bf16.msra.mxu0 0
  %2042 = vmatprep.subr.bf16.mxu0 0
  %2043 = vmatpush1.bf16.msra.mxu0 0
  %2044 = vmatprep.subr.bf16.mxu0 0
  %2045 = vmatpush1.bf16.msra.mxu0 0
  %2046 = vmatprep.subr.bf16.mxu0 0
  %2047 = vmatpush1.bf16.msra.mxu0 0
  %2048 = vmatprep.subr.bf16.mxu0 0
  %2049 = vmatpush1.bf16.msra.mxu0 0
  %2050 = vmatprep.subr.bf16.mxu0 0
  %2051 = vmatpush1.bf16.msra.mxu0 0
  %2052 = vmatprep.mubr.bf16.mxu0 0
  %2053 = vmatmul.mubr.bf16.gmra.mrb[0].mxu0 %v1659
  %v2054 = vpop.f32.mrb[0].mxu0
  %v2055 = vadd.f32 %v1862, %v2054
  %v2056 = vpop.f32.mrb[0].mxu0
  %v2057 = vadd.f32 %v1864, %v2056
  %v2058 = vpop.f32.mrb[0].mxu0
  %v2059 = vadd.f32 %v1866, %v2058
  %v2060 = vpop.f32.mrb[0].mxu0
  %v2061 = vadd.f32 %v1868, %v2060
  %2062 = vmatprep.mubr.bf16.mxu0 0
  %2063 = vmatmul.mubr.bf16.gmra.mrb[0].mxu0 %v1660
  %v2064 = vpop.f32.mrb[0].mxu0
  %v2065 = vadd.f32 %v1872, %v2064
  %v2066 = vpop.f32.mrb[0].mxu0
  %v2067 = vadd.f32 %v1874, %v2066
  %v2068 = vpop.f32.mrb[0].mxu0
  %v2069 = vadd.f32 %v1876, %v2068
  %v2070 = vpop.f32.mrb[0].mxu0
  %v2071 = vadd.f32 %v1878, %v2070
  %2072 = vmatprep.mubr.bf16.mxu0 0
  %2073 = vmatmul.mubr.bf16.gmra.mrb[0].mxu0 %v1661
  %v2074 = vpop.f32.mrb[0].mxu0
  %v2075 = vadd.f32 %v1882, %v2074
  %v2076 = vpop.f32.mrb[0].mxu0
  %v2077 = vadd.f32 %v1884, %v2076
  %v2078 = vpop.f32.mrb[0].mxu0
  %v2079 = vadd.f32 %v1886, %v2078
  %v2080 = vpop.f32.mrb[0].mxu0
  %v2081 = vadd.f32 %v1888, %v2080
  %2082 = vmatprep.mubr.bf16.mxu0 0
  %2083 = vmatmul.mubr.bf16.gmra.mrb[0].mxu0 %v1662
  %v2084 = vpop.f32.mrb[0].mxu0
  %v2085 = vadd.f32 %v1892, %v2084
  %v2086 = vpop.f32.mrb[0].mxu0
  %v2087 = vadd.f32 %v1894, %v2086
  %v2088 = vpop.f32.mrb[0].mxu0
  %v2089 = vadd.f32 %v1896, %v2088
  %v2090 = vpop.f32.mrb[0].mxu0
  %v2091 = vadd.f32 %v1898, %v2090
  %2092 = vmatprep.mubr.bf16.mxu0 0
  %2093 = vmatmul.mubr.bf16.gmra.mrb[0].mxu0 %v1663
  %v2094 = vpop.f32.mrb[0].mxu0
  %v2095 = vadd.f32 %v1902, %v2094
  %v2096 = vpop.f32.mrb[0].mxu0
  %v2097 = vadd.f32 %v1904, %v2096
  %v2098 = vpop.f32.mrb[0].mxu0
  %v2099 = vadd.f32 %v1906, %v2098
  %v2100 = vpop.f32.mrb[0].mxu0
  %v2101 = vadd.f32 %v1908, %v2100
  %2102 = vmatprep.mubr.bf16.mxu0 0
  %2103 = vmatmul.mubr.bf16.gmra.mrb[0].mxu0 %v1664
  %v2104 = vpop.f32.mrb[0].mxu0
  %v2105 = vadd.f32 %v1912, %v2104
  %v2106 = vpop.f32.mrb[0].mxu0
  %v2107 = vadd.f32 %v1914, %v2106
  %v2108 = vpop.f32.mrb[0].mxu0
  %v2109 = vadd.f32 %v1916, %v2108
  %v2110 = vpop.f32.mrb[0].mxu0
  %v2111 = vadd.f32 %v1918, %v2110
  %2112 = vmatprep.mubr.bf16.mxu0 0
  %2113 = vmatmul.mubr.bf16.gmra.mrb[0].mxu0 %v1665
  %v2114 = vpop.f32.mrb[0].mxu0
  %v2115 = vadd.f32 %v1922, %v2114
  %v2116 = vpop.f32.mrb[0].mxu0
  %v2117 = vadd.f32 %v1924, %v2116
  %v2118 = vpop.f32.mrb[0].mxu0
  %v2119 = vadd.f32 %v1926, %v2118
  %v2120 = vpop.f32.mrb[0].mxu0
  %v2121 = vadd.f32 %v1928, %v2120
  %2122 = vmatprep.mubr.bf16.mxu0 0
  %2123 = vmatmul.mubr.bf16.gmra.mrb[0].mxu0 %v1666
  %v2124 = vpop.f32.mrb[0].mxu0
  %v2125 = vadd.f32 %v1932, %v2124
  %v2126 = vpop.f32.mrb[0].mxu0
  %v2127 = vadd.f32 %v1934, %v2126
  %v2128 = vpop.f32.mrb[0].mxu0
  %v2129 = vadd.f32 %v1936, %v2128
  %v2130 = vpop.f32.mrb[0].mxu0
  %v2131 = vadd.f32 %v1938, %v2130
  %2132 = vdwg.mxu0
  %v2133 = vld [vmem:[%s6] sm:$0x3]
  %v2135 = vlaneseq
  %v2136 = vshrl.u32 %v2135, 7
  %v2137 = vsub.s32 0, %v2136
  %v2138 = vrot.slane %v2133, %v2137
  %v2139 = vlaneseq
  %v2140 = vshrl.u32 %v2139, 7
  %v2141 = vsub.s32 1, %v2140
  %v2142 = vrot.slane %v2133, %v2141
  %v2145 = vadd.f32 %v2055, %v2138
  %v2146 = vadd.f32 %v2057, %v2142
  %v2147 = vadd.f32 %v2059, %v2138
  %v2148 = vadd.f32 %v2061, %v2142
  %v2149 = vadd.f32 %v2065, %v2138
  %v2150 = vadd.f32 %v2067, %v2142
  %v2151 = vadd.f32 %v2069, %v2138
  %v2152 = vadd.f32 %v2071, %v2142
  %v2153 = vadd.f32 %v2075, %v2138
  %v2154 = vadd.f32 %v2077, %v2142
  %v2155 = vadd.f32 %v2079, %v2138
  %v2156 = vadd.f32 %v2081, %v2142
  %v2157 = vadd.f32 %v2085, %v2138
  %v2158 = vadd.f32 %v2087, %v2142
  %v2159 = vadd.f32 %v2089, %v2138
  %v2160 = vadd.f32 %v2091, %v2142
  %v2161 = vadd.f32 %v2095, %v2138
  %v2162 = vadd.f32 %v2097, %v2142
  %v2163 = vadd.f32 %v2099, %v2138
  %v2164 = vadd.f32 %v2101, %v2142
  %v2165 = vadd.f32 %v2105, %v2138
  %v2166 = vadd.f32 %v2107, %v2142
  %v2167 = vadd.f32 %v2109, %v2138
  %v2168 = vadd.f32 %v2111, %v2142
  %v2169 = vadd.f32 %v2115, %v2138
  %v2170 = vadd.f32 %v2117, %v2142
  %v2171 = vadd.f32 %v2119, %v2138
  %v2172 = vadd.f32 %v2121, %v2142
  %v2173 = vadd.f32 %v2125, %v2138
  %v2174 = vadd.f32 %v2127, %v2142
  %v2175 = vadd.f32 %v2129, %v2138
  %v2176 = vadd.f32 %v2131, %v2142
  %v2177 = vmax.f32 %v2145, 0.0
  %v2178 = vmax.f32 %v2146, 0.0
  %v2179 = vmax.f32 %v2147, 0.0
  %v2180 = vmax.f32 %v2148, 0.0
  %v2181 = vmax.f32 %v2149, 0.0
  %v2182 = vmax.f32 %v2150, 0.0
  %v2183 = vmax.f32 %v2151, 0.0
  %v2184 = vmax.f32 %v2152, 0.0
  %v2185 = vmax.f32 %v2153, 0.0
  %v2186 = vmax.f32 %v2154, 0.0
  %v2187 = vmax.f32 %v2155, 0.0
  %v2188 = vmax.f32 %v2156, 0.0
  %v2189 = vmax.f32 %v2157, 0.0
  %v2190 = vmax.f32 %v2158, 0.0
  %v2191 = vmax.f32 %v2159, 0.0
  %v2192 = vmax.f32 %v2160, 0.0
  %v2193 = vmax.f32 %v2161, 0.0
  %v2194 = vmax.f32 %v2162, 0.0
  %v2195 = vmax.f32 %v2163, 0.0
  %v2196 = vmax.f32 %v2164, 0.0
  %v2197 = vmax.f32 %v2165, 0.0
  %v2198 = vmax.f32 %v2166, 0.0
  %v2199 = vmax.f32 %v2167, 0.0
  %v2200 = vmax.f32 %v2168, 0.0
  %v2201 = vmax.f32 %v2169, 0.0
  %v2202 = vmax.f32 %v2170, 0.0
  %v2203 = vmax.f32 %v2171, 0.0
  %v2204 = vmax.f32 %v2172, 0.0
  %v2205 = vmax.f32 %v2173, 0.0
  %v2206 = vmax.f32 %v2174, 0.0
  %v2207 = vmax.f32 %v2175, 0.0
  %v2208 = vmax.f32 %v2176, 0.0
  %2209 = vst [vmem:[%s7] sm:$0xff] %v2177
  %2210 = vst [vmem:[%s7 + $0x8] sm:$0xff] %v2178
  %2211 = vst [vmem:[%s7 + $0x10] sm:$0xff] %v2179
  %2212 = vst [vmem:[%s7 + $0x18] sm:$0xff] %v2180
  %2213 = vst [vmem:[%s7 + $0x20] sm:$0xff] %v2181
  %2214 = vst [vmem:[%s7 + $0x28] sm:$0xff] %v2182
  %2215 = vst [vmem:[%s7 + $0x30] sm:$0xff] %v2183
  %2216 = vst [vmem:[%s7 + $0x38] sm:$0xff] %v2184
  %2217 = vst [vmem:[%s7 + $0x40] sm:$0xff] %v2185
  %2218 = vst [vmem:[%s7 + $0x48] sm:$0xff] %v2186
  %2219 = vst [vmem:[%s7 + $0x50] sm:$0xff] %v2187
  %2220 = vst [vmem:[%s7 + $0x58] sm:$0xff] %v2188
  %2221 = vst [vmem:[%s7 + $0x60] sm:$0xff] %v2189
  %2222 = vst [vmem:[%s7 + $0x68] sm:$0xff] %v2190
  %2223 = vst [vmem:[%s7 + $0x70] sm:$0xff] %v2191
  %2224 = vst [vmem:[%s7 + $0x78] sm:$0xff] %v2192
  %2225 = vst [vmem:[%s7 + $0x80] sm:$0xff] %v2193
  %2226 = vst [vmem:[%s7 + $0x88] sm:$0xff] %v2194
  %2227 = vst [vmem:[%s7 + $0x90] sm:$0xff] %v2195
  %2228 = vst [vmem:[%s7 + $0x98] sm:$0xff] %v2196
  %2229 = vst [vmem:[%s7 + $0xa0] sm:$0xff] %v2197
  %2230 = vst [vmem:[%s7 + $0xa8] sm:$0xff] %v2198
  %2231 = vst [vmem:[%s7 + $0xb0] sm:$0xff] %v2199
  %2232 = vst [vmem:[%s7 + $0xb8] sm:$0xff] %v2200
  %2233 = vst [vmem:[%s7 + $0xc0] sm:$0xff] %v2201
  %2234 = vst [vmem:[%s7 + $0xc8] sm:$0xff] %v2202
  %2235 = vst [vmem:[%s7 + $0xd0] sm:$0xff] %v2203
  %2236 = vst [vmem:[%s7 + $0xd8] sm:$0xff] %v2204
  %2237 = vst [vmem:[%s7 + $0xe0] sm:$0xff] %v2205
  %2238 = vst [vmem:[%s7 + $0xe8] sm:$0xff] %v2206
  %2239 = vst [vmem:[%s7 + $0xf0] sm:$0xff] %v2207
  %2240 = vst [vmem:[%s7 + $0xf8] sm:$0xff] %v2208
  // Predicated region
  $region30: #{_lambda_.1} parent=0 // pred_check
    _
  $region31: #{_lambda_.1} parent=0 // pred_check_branch
    %2242 = sbr.rel (0) target = $region33
  $region32: #{_lambda_.1} parent=0 // pred_region
    _
  $region33: #{_lambda_.1} parent=0 // pred_fallthru
    _
  // Predicated region
  $region34: #{_lambda_.1} parent=0 // pred_check
    _
  $region35: #{_lambda_.1} parent=0 // pred_check_branch
    %2244 = sbr.rel (0) target = $region37
  $region36: #{_lambda_.1} parent=0 // pred_region
    _
  $region37: #{_lambda_.1} parent=0 // pred_fallthru
    _

</llo_original>
